<compile_context>
chip_gen: v7x
topology: tpu7x:2x2x1
jax: 0.10.0
libtpu: 0.0.40
codegen_flags: <defaults>
</compile_context>

<pallas_src>
import functools

import jax
import jax.numpy as jnp
from jax.experimental import pallas as pl
from jax.experimental.pallas import tpu as pltpu

LN_EPS = 1e-5
_NEG_INF = -1e30


def _round_up(x, m):
    return (x + m - 1) // m * m


def _cdiv(a, b):
    return -(-a // b)


def _layer_norm(v, g, b):
    mu = jnp.mean(v, axis=-1, keepdims=True)
    var = jnp.mean((v - mu) ** 2, axis=-1, keepdims=True)
    return (v - mu) * jax.lax.rsqrt(var + LN_EPS) * g + b


def _pick_head_group(n_head, head_dim):
    """Heads per attn-scratch store so the stored slab is lane-dense."""
    if head_dim % 128 == 0:
        return 1
    for g in range(1, n_head + 1):
        if n_head % g == 0 and (g * head_dim) % 128 == 0:
            return g
    # tiny models: store all heads at once if they fit in one 128-lane tile
    return n_head if n_head * head_dim <= 128 else 1


def _pick_hidden_chunk(hidden, cap=2048):
    """Largest multiple-of-128 divisor of the MLP hidden dim that is <= cap."""
    if hidden <= cap:
        return hidden
    c = cap - cap % 128
    while c >= 128:
        if hidden % c == 0:
            return c
        c -= 128
    return hidden


def _block_kernel(x_ref, g1_ref, b1_ref, wqkv_ref, bqkv_ref, wo_ref, bo_ref,
                  g2_ref, b2_ref, wfc_ref, bfc_ref, wpr_ref, bpr_ref,
                  o_ref, attn_ref, *, n_head, head_dim, head_group, seq_len,
                  key_len, hidden_chunk):
    nb, lp, d = x_ref.shape
    r = nb * lp
    hd = head_dim
    hg = head_group
    gw = hg * hd
    cdt = wqkv_ref.dtype                       # MXU input dtype (f32 or bf16)

    x = x_ref[...].astype(jnp.float32).reshape(r, d)

    # ---- ln_1 + fused QKV projection (softmax scale folded into Q) --------
    xn = _layer_norm(x, g1_ref[...], b1_ref[...]).astype(cdt)
    qkv = jnp.dot(xn, wqkv_ref[...],
                  preferred_element_type=jnp.float32) + bqkv_ref[...]  # (r,3d) f32

    q_all = qkv[:, :d].reshape(nb, lp, d).astype(cdt)
    k_all = qkv[:, d:2 * d].reshape(nb, lp, d).astype(cdt)
    v_all = qkv[:, 2 * d:].reshape(nb, lp, d).astype(cdt)
    if key_len > lp:                           # lane-dense key/value length
        k_all = jnp.pad(k_all, ((0, 0), (0, key_len - lp), (0, 0)))
        v_all = jnp.pad(v_all, ((0, 0), (0, key_len - lp), (0, 0)))

    # hoisted additive key mask (one bias, re-used by every head)
    key_bias = None
    if key_len > seq_len:
        kid = jax.lax.broadcasted_iota(jnp.int32, (1, 1, key_len), 2)
        key_bias = jnp.where(kid < seq_len, 0.0, _NEG_INF).astype(jnp.float32)

    # ---- attention: per-head math, lane-dense grouped stores ---------------
    for g in range(n_head // hg):
        outs = []
        for hh in range(hg):
            h = g * hg + hh
            q = q_all[:, :, h * hd:(h + 1) * hd]
            k = k_all[:, :, h * hd:(h + 1) * hd]
            v = v_all[:, :, h * hd:(h + 1) * hd]

            s = jnp.einsum("bqd,bkd->bqk", q, k,
                           preferred_element_type=jnp.float32)      # (nb,lp,key_len)
            if key_bias is not None:
                s = s + key_bias
            s = s - jnp.max(s, axis=-1, keepdims=True)
            p = jnp.exp(s)
            p = p * pl.reciprocal(jnp.sum(p, axis=-1, keepdims=True), approx=True)

            outs.append(jnp.einsum("bqk,bkd->bqd", p.astype(cdt), v,
                                   preferred_element_type=jnp.float32))
        slab = outs[0] if hg == 1 else jnp.concatenate(outs, axis=-1)
        attn_ref[:, g * gw:(g + 1) * gw] = slab.reshape(r, gw).astype(cdt)

    # ---- fused output projection + residual 1 ------------------------------
    attn = jnp.dot(attn_ref[...], wo_ref[...],
                   preferred_element_type=jnp.float32) + bo_ref[...]
    x1 = x + attn

    # ---- ln_2 + MLP (c_fc -> QuickGELU -> c_proj, hidden dim tiled) --------
    x2n = _layer_norm(x1, g2_ref[...], b2_ref[...]).astype(cdt)
    hid = wfc_ref.shape[1]
    acc = x1 + bpr_ref[...]                    # residual 2 + c_proj bias
    for c0 in range(0, hid, hidden_chunk):     # static loop over ref slices
        c1 = c0 + hidden_chunk
        hfc = jnp.dot(x2n, wfc_ref[:, c0:c1],
                      preferred_element_type=jnp.float32) + bfc_ref[:, c0:c1]
        hact = (hfc * jax.nn.sigmoid(1.702 * hfc)).astype(cdt)      # QuickGELU
        acc = acc + jnp.dot(hact, wpr_ref[c0:c1, :],
                            preferred_element_type=jnp.float32)

    o_ref[...] = acc.reshape(nb, lp, d).astype(o_ref.dtype)


def prepare_params(params, n_head, *, dtype=jnp.bfloat16):
    """One-time conversion of PyTorch-layout weights into kernel operands.

    Weights are cast to `dtype` (bf16 by default — required for v7x VMEM at
    production D and MXU-native everywhere); biases / LayerNorm params stay
    f32. The 1/sqrt(head_dim) softmax scale is folded into the Q projection.
    """
    w_in = jnp.asarray(params["w_in"], jnp.float32)       # (3D, D)
    b_in = jnp.asarray(params["b_in"], jnp.float32)       # (3D,)
    d = w_in.shape[1]
    assert d % n_head == 0
    hd = d // n_head
    scale = 1.0 / float(hd) ** 0.5

    w_qkv = jnp.concatenate(
        [w_in[:d].T * scale, w_in[d:2 * d].T, w_in[2 * d:].T], axis=1)  # (D, 3D)
    b_qkv = jnp.concatenate([b_in[:d] * scale, b_in[d:]]).reshape(1, 3 * d)

    return dict(
        g1=jnp.asarray(params["g1"], jnp.float32).reshape(1, d),
        b1=jnp.asarray(params["b1"], jnp.float32).reshape(1, d),
        w_qkv=w_qkv.astype(dtype),
        b_qkv=b_qkv.astype(jnp.float32),
        w_out=jnp.asarray(params["w_out"], jnp.float32).T.astype(dtype),    # (D, D)
        b_out=jnp.asarray(params["b_out"], jnp.float32).reshape(1, d),
        g2=jnp.asarray(params["g2"], jnp.float32).reshape(1, d),
        b2=jnp.asarray(params["b2"], jnp.float32).reshape(1, d),
        w_fc=jnp.asarray(params["w_fc"], jnp.float32).T.astype(dtype),      # (D, 4D)
        b_fc=jnp.asarray(params["b_fc"], jnp.float32).reshape(1, 4 * d),
        w_proj=jnp.asarray(params["w_proj"], jnp.float32).T.astype(dtype),  # (4D, D)
        b_proj=jnp.asarray(params["b_proj"], jnp.float32).reshape(1, d),
    )


def residual_attention_block(x, prepared, n_head, *, block_batch=8):
    """x: (L, N, D) float32, PyTorch CLIP convention. Returns (L, N, D)."""
    L, N, D = x.shape
    assert D % n_head == 0
    hd = D // n_head

    # sequence padding: sublane-aligned; key/value axis of the attention path
    # additionally padded to a multiple of 128 (lane-dense softmax / PV matmul)
    lp = _round_up(L, 8)
    lpk = _round_up(lp, 128) if lp > 128 else lp

    # batch blocking: even number of grid steps (>=2 when N>1) so v7x's two
    # TensorCores stay balanced; nb is the per-step batch block.
    # TODO(synk): on v6e (128 MiB VMEM) growing block_batch so nb*lp is a
    #             multiple of 256 avoids ragged MXU M-tiles.
    nb = max(1, min(block_batch, N))
    steps = _cdiv(N, nb)
    if N > 1 and steps == 1:
        steps = 2
    if steps > 1 and steps % 2 == 1:
        steps += 1
    nb = _cdiv(N, steps)
    npad = nb * steps

    xb = jnp.transpose(x, (1, 0, 2))         # (N, L, D)
    if (npad, lp) != (N, L):
        xb = jnp.pad(xb, ((0, npad - N), (0, lp - L), (0, 0)))

    p = prepared
    weight_ops = (p["g1"], p["b1"], p["w_qkv"], p["b_qkv"], p["w_out"],
                  p["b_out"], p["g2"], p["b2"], p["w_fc"], p["b_fc"],
                  p["w_proj"], p["b_proj"])
    cdt = p["w_qkv"].dtype
    hg = _pick_head_group(n_head, hd)
    hchunk = _pick_hidden_chunk(4 * D)

    def _weight_spec(arr):
        nd = arr.ndim
        imap = (lambda n, _nd=nd: (0,) * _nd)
        # grid-invariant blocks: single buffer (double-buffering is pure VMEM waste)
        if hasattr(pl, "Buffered"):
            try:
                return pl.BlockSpec(arr.shape, imap, pipeline_mode=pl.Buffered(1))
            except TypeError:
                pass
        return pl.BlockSpec(arr.shape, imap)

    # ---- tight scoped-VMEM budget ------------------------------------------
    r = nb * lp
    cb = jnp.dtype(cdt).itemsize
    w_bytes = sum(int(a.size) * a.dtype.itemsize for a in weight_ops)  # Buffered(1)
    io_bytes = 2 * 2 * nb * lp * D * 4                                 # x & o, 2-buffered
    work = (r * 3 * D * (4 + cb)          # qkv f32 + q/k/v cdt copies
            + r * D * cb                  # attn scratch (compute dtype)
            + 2 * nb * lp * lpk * 4       # one live head: scores + probs
            + 2 * r * hchunk * 4          # one live MLP hidden chunk
            + 3 * r * D * 4)              # x, x1, mlp accumulator
    est = w_bytes + io_bytes + work + (4 << 20)
    try:
        phys = int(getattr(pltpu.get_tpu_info(), "vmem_capacity_bytes", 64 << 20))
    except Exception:
        phys = 64 << 20
    vmem_limit = int(min(int(phys * 3 // 4), max(32 << 20, est)))

    kernel = functools.partial(_block_kernel, n_head=n_head, head_dim=hd,
                               head_group=hg, seq_len=L, key_len=lpk,
                               hidden_chunk=hchunk)

    out = pl.pallas_call(
        kernel,
        out_shape=jax.ShapeDtypeStruct((npad, lp, D), jnp.float32),
        grid_spec=pltpu.PrefetchScalarGridSpec(
            num_scalar_prefetch=0,
            grid=(npad // nb,),
            in_specs=[pl.BlockSpec((nb, lp, D), lambda n: (n, 0, 0))]
                     + [_weight_spec(a) for a in weight_ops],
            out_specs=pl.BlockSpec((nb, lp, D), lambda n: (n, 0, 0)),
            scratch_shapes=[pltpu.VMEM((nb * lp, D), cdt)],
        ),
        compiler_params=pltpu.CompilerParams(
            dimension_semantics=("parallel",),
            vmem_limit_bytes=vmem_limit),
    )(xb, *weight_ops)

    out = out[:N, :L, :]
    return jnp.transpose(out, (1, 0, 2))     # back to (L, N, D)


# ----------------------- pure-JAX reference ------------------------------
def ref_block(x, p, n_head):
    L, N, D = x.shape
    hd = D // n_head

    def ln(v, g, b):
        mu = v.mean(-1, keepdims=True)
        var = ((v - mu) ** 2).mean(-1, keepdims=True)
        return (v - mu) / jnp.sqrt(var + LN_EPS) * g + b

    xn = ln(x, p["g1"], p["b1"])
    qkv = xn @ p["w_in"].T + p["b_in"]              # (L, N, 3D)
    q, k, v = jnp.split(qkv, 3, axis=-1)

    def split_heads(t):                             # (L, N, D) -> (N, H, L, hd)
        return t.reshape(L, N, n_head, hd).transpose(1, 2, 0, 3)

    qh, kh, vh = map(split_heads, (q, k, v))
    s = jnp.einsum("nhqd,nhkd->nhqk", qh * (1.0 / (hd ** 0.5)), kh)
    pm = jax.nn.softmax(s, axis=-1)
    oh = jnp.einsum("nhqk,nhkd->nhqd", pm, vh)
    o = oh.transpose(2, 0, 1, 3).reshape(L, N, D)
    attn = o @ p["w_out"].T + p["b_out"]
    x1 = x + attn
    x2n = ln(x1, p["g2"], p["b2"])
    h = x2n @ p["w_fc"].T + p["b_fc"]
    h = h * jax.nn.sigmoid(1.702 * h)
    mlp = h @ p["w_proj"].T + p["b_proj"]
    return x1 + mlp


if __name__ == "__main__":
    def make_params(key, D):
        ks = jax.random.split(key, 12)
        return {
            "w_in":   0.02 * jax.random.normal(ks[0], (3 * D, D), jnp.float32),
            "b_in":   0.01 * jax.random.normal(ks[1], (3 * D,), jnp.float32),
            "w_out":  0.02 * jax.random.normal(ks[2], (D, D), jnp.float32),
            "b_out":  0.01 * jax.random.normal(ks[3], (D,), jnp.float32),
            "g1":     1.0 + 0.01 * jax.random.normal(ks[4], (D,), jnp.float32),
            "b1":     0.01 * jax.random.normal(ks[5], (D,), jnp.float32),
            "g2":     1.0 + 0.01 * jax.random.normal(ks[6], (D,), jnp.float32),
            "b2":     0.01 * jax.random.normal(ks[7], (D,), jnp.float32),
            "w_fc":   0.02 * jax.random.normal(ks[8], (4 * D, D), jnp.float32),
            "b_fc":   0.01 * jax.random.normal(ks[9], (4 * D,), jnp.float32),
            "w_proj": 0.02 * jax.random.normal(ks[10], (D, 4 * D), jnp.float32),
            "b_proj": 0.01 * jax.random.normal(ks[11], (D,), jnp.float32),
        }

    key = jax.random.PRNGKey(0)
    k1, k2, k3, k4, k5, k6 = jax.random.split(key, 6)

    # --- case 1: f32 weights, aligned shapes --------------------------------
    L, N, D, H = 8, 2, 32, 4
    params = make_params(k1, D)
    x = jax.random.normal(k2, (L, N, D), jnp.float32)
    prepared = prepare_params(params, H, dtype=jnp.float32)
    out = jax.block_until_ready(residual_attention_block(x, prepared, H))
    ref = ref_block(x, params, H)
    assert out.shape == (L, N, D)
    err = float(jnp.max(jnp.abs(out - ref)))
    assert err < 2e-3, err

    # --- case 2: bf16 (default) weights, unaligned L and N ------------------
    L2, N2, D2, H2 = 10, 5, 64, 4
    params2 = make_params(k3, D2)
    x2 = jax.random.normal(k4, (L2, N2, D2), jnp.float32)
    prepared2 = prepare_params(params2, H2)              # default bf16
    out2 = jax.block_until_ready(residual_attention_block(x2, prepared2, H2))
    ref2 = ref_block(x2, params2, H2)
    assert out2.shape == (L2, N2, D2)
    err2 = float(jnp.max(jnp.abs(out2 - ref2)))
    assert err2 < 5e-2, err2

    # --- case 3: L > 128 exercises the lane-dense key padding + masking -----
    L3, N3, D3, H3 = 130, 3, 64, 4
    params3 = make_params(k5, D3)
    x3 = jax.random.normal(k6, (L3, N3, D3), jnp.float32)
    prepared3 = prepare_params(params3, H3)              # default bf16
    out3 = jax.block_until_ready(residual_attention_block(x3, prepared3, H3))
    ref3 = ref_block(x3, params3, H3)
    assert out3.shape == (L3, N3, D3)
    err3 = float(jnp.max(jnp.abs(out3 - ref3)))
    assert err3 < 8e-2, err3

    print("KERNEL_OK")
</pallas_src>

<mosaic_0001>
module attributes {stable_mosaic.version = 11 : i64} {
  func.func @_block_kernel(%arg0: i32, %arg1: memref<1x8x32xf32, #tpu.memory_space<vmem>>, %arg2: memref<1x32xf32, #tpu.memory_space<vmem>>, %arg3: memref<1x32xf32, #tpu.memory_space<vmem>>, %arg4: memref<32x96xf32, #tpu.memory_space<vmem>>, %arg5: memref<1x96xf32, #tpu.memory_space<vmem>>, %arg6: memref<32x32xf32, #tpu.memory_space<vmem>>, %arg7: memref<1x32xf32, #tpu.memory_space<vmem>>, %arg8: memref<1x32xf32, #tpu.memory_space<vmem>>, %arg9: memref<1x32xf32, #tpu.memory_space<vmem>>, %arg10: memref<32x128xf32, #tpu.memory_space<vmem>>, %arg11: memref<1x128xf32, #tpu.memory_space<vmem>>, %arg12: memref<128x32xf32, #tpu.memory_space<vmem>>, %arg13: memref<1x32xf32, #tpu.memory_space<vmem>>, %arg14: memref<1x8x32xf32, #tpu.memory_space<vmem>>, %arg15: memref<8x32xf32, #tpu.memory_space<vmem>>) attributes {dimension_semantics = [#tpu.dimension_semantics<parallel>], iteration_bounds = array<i64: 2>, scalar_prefetch = 0 : i64, scratch_operands = 1 : i64, tpu.core_type = #tpu.core_type<tc>, window_params = [{transform_indices = @transform_0, window_bounds = array<i64: 1, 8, 32>}, {pipeline_mode = #tpu.pipeline_mode<synchronous>, transform_indices = @transform_1, window_bounds = array<i64: 1, 32>}, {pipeline_mode = #tpu.pipeline_mode<synchronous>, transform_indices = @transform_2, window_bounds = array<i64: 1, 32>}, {pipeline_mode = #tpu.pipeline_mode<synchronous>, transform_indices = @transform_3, window_bounds = array<i64: 32, 96>}, {pipeline_mode = #tpu.pipeline_mode<synchronous>, transform_indices = @transform_4, window_bounds = array<i64: 1, 96>}, {pipeline_mode = #tpu.pipeline_mode<synchronous>, transform_indices = @transform_5, window_bounds = array<i64: 32, 32>}, {pipeline_mode = #tpu.pipeline_mode<synchronous>, transform_indices = @transform_6, window_bounds = array<i64: 1, 32>}, {pipeline_mode = #tpu.pipeline_mode<synchronous>, transform_indices = @transform_7, window_bounds = array<i64: 1, 32>}, {pipeline_mode = #tpu.pipeline_mode<synchronous>, transform_indices = @transform_8, window_bounds = array<i64: 1, 32>}, {pipeline_mode = #tpu.pipeline_mode<synchronous>, transform_indices = @transform_9, window_bounds = array<i64: 32, 128>}, {pipeline_mode = #tpu.pipeline_mode<synchronous>, transform_indices = @transform_10, window_bounds = array<i64: 1, 128>}, {pipeline_mode = #tpu.pipeline_mode<synchronous>, transform_indices = @transform_11, window_bounds = array<i64: 128, 32>}, {pipeline_mode = #tpu.pipeline_mode<synchronous>, transform_indices = @transform_12, window_bounds = array<i64: 1, 32>}, {transform_indices = @transform_13, window_bounds = array<i64: 1, 8, 32>}]} {
    %c0 = arith.constant 0 : index
    %c0_0 = arith.constant 0 : index
    %c0_1 = arith.constant 0 : index
    %0 = vector.load %arg1[%c0, %c0_0, %c0_1] : memref<1x8x32xf32, #tpu.memory_space<vmem>>, vector<1x8x32xf32>
    %1 = vector.shape_cast %0 : vector<1x8x32xf32> to vector<8x32xf32>
    %c0_2 = arith.constant 0 : index
    %c0_3 = arith.constant 0 : index
    %2 = vector.load %arg2[%c0_2, %c0_3] : memref<1x32xf32, #tpu.memory_space<vmem>>, vector<1x32xf32>
    %c0_4 = arith.constant 0 : index
    %c0_5 = arith.constant 0 : index
    %3 = vector.load %arg3[%c0_4, %c0_5] : memref<1x32xf32, #tpu.memory_space<vmem>>, vector<1x32xf32>
    %cst = arith.constant dense<0.000000e+00> : vector<8xf32>
    %4 = vector.multi_reduction <add>, %1, %cst [1] : vector<8x32xf32> to vector<8xf32>
    %5 = vector.shape_cast %4 : vector<8xf32> to vector<8x1xf32>
    %cst_6 = arith.constant 3.200000e+01 : f32
    %6 = vector.broadcast %cst_6 : f32 to vector<8x1xf32>
    %7 = arith.divf %5, %6 : vector<8x1xf32>
    %8 = vector.broadcast %7 : vector<8x1xf32> to vector<8x32xf32>
    %9 = arith.subf %1, %8 : vector<8x32xf32>
    %10 = arith.mulf %9, %9 : vector<8x32xf32>
    %cst_7 = arith.constant dense<0.000000e+00> : vector<8xf32>
    %11 = vector.multi_reduction <add>, %10, %cst_7 [1] : vector<8x32xf32> to vector<8xf32>
    %12 = vector.shape_cast %11 : vector<8xf32> to vector<8x1xf32>
    %cst_8 = arith.constant 3.200000e+01 : f32
    %13 = vector.broadcast %cst_8 : f32 to vector<8x1xf32>
    %14 = arith.divf %12, %13 : vector<8x1xf32>
    %15 = vector.broadcast %7 : vector<8x1xf32> to vector<8x32xf32>
    %16 = arith.subf %1, %15 : vector<8x32xf32>
    %cst_9 = arith.constant 9.99999974E-6 : f32
    %17 = vector.broadcast %cst_9 : f32 to vector<8x1xf32>
    %18 = arith.addf %14, %17 : vector<8x1xf32>
    %19 = math.rsqrt %18 : vector<8x1xf32>
    %20 = vector.broadcast %19 : vector<8x1xf32> to vector<8x32xf32>
    %21 = arith.mulf %16, %20 : vector<8x32xf32>
    %22 = vector.broadcast %2 : vector<1x32xf32> to vector<8x32xf32>
    %23 = arith.mulf %21, %22 : vector<8x32xf32>
    %24 = vector.broadcast %3 : vector<1x32xf32> to vector<8x32xf32>
    %25 = arith.addf %23, %24 : vector<8x32xf32>
    %c0_10 = arith.constant 0 : index
    %c0_11 = arith.constant 0 : index
    %26 = vector.load %arg4[%c0_10, %c0_11] : memref<32x96xf32, #tpu.memory_space<vmem>>, vector<32x96xf32>
    %cst_12 = arith.constant dense<0.000000e+00> : vector<8x96xf32>
    %27 = tpu.matmul %25, %26, %cst_12 {dimension_numbers = #tpu.dot_dimension_numbers<[1], [0], [0], [1], [0, 0, 1, 1], [], []>} : vector<8x32xf32>, vector<32x96xf32>, vector<8x96xf32> -> vector<8x96xf32>
    %c0_13 = arith.constant 0 : index
    %c0_14 = arith.constant 0 : index
    %28 = vector.load %arg5[%c0_13, %c0_14] : memref<1x96xf32, #tpu.memory_space<vmem>>, vector<1x96xf32>
    %29 = vector.broadcast %28 : vector<1x96xf32> to vector<8x96xf32>
    %30 = arith.addf %27, %29 : vector<8x96xf32>
    %31 = vector.extract_strided_slice %30 {offsets = [0, 0], sizes = [8, 32], strides = [1, 1]} : vector<8x96xf32> to vector<8x32xf32>
    %32 = vector.shape_cast %31 : vector<8x32xf32> to vector<1x8x32xf32>
    %33 = vector.extract_strided_slice %30 {offsets = [0, 32], sizes = [8, 32], strides = [1, 1]} : vector<8x96xf32> to vector<8x32xf32>
    %34 = vector.shape_cast %33 : vector<8x32xf32> to vector<1x8x32xf32>
    %35 = vector.extract_strided_slice %30 {offsets = [0, 64], sizes = [8, 32], strides = [1, 1]} : vector<8x96xf32> to vector<8x32xf32>
    %36 = vector.shape_cast %35 : vector<8x32xf32> to vector<1x8x32xf32>
    %37 = vector.extract_strided_slice %32 {offsets = [0, 0, 0], sizes = [1, 8, 8], strides = [1, 1, 1]} : vector<1x8x32xf32> to vector<1x8x8xf32>
    %38 = vector.extract_strided_slice %34 {offsets = [0, 0, 0], sizes = [1, 8, 8], strides = [1, 1, 1]} : vector<1x8x32xf32> to vector<1x8x8xf32>
    %39 = vector.extract_strided_slice %36 {offsets = [0, 0, 0], sizes = [1, 8, 8], strides = [1, 1, 1]} : vector<1x8x32xf32> to vector<1x8x8xf32>
    "tpu.trace_start"() <{level = 10 : i32, message = "bqd,bkd->bqk"}> : () -> ()
    %cst_15 = arith.constant dense<0.000000e+00> : vector<1x8x8xf32>
    %40 = tpu.matmul %37, %38, %cst_15 {dimension_numbers = #tpu.dot_dimension_numbers<[2], [2], [1], [1], [0, 0, 0, 1, 1, 1], [0], [0]>} : vector<1x8x8xf32>, vector<1x8x8xf32>, vector<1x8x8xf32> -> vector<1x8x8xf32>
    "tpu.trace_stop"() : () -> ()
    %cst_16 = arith.constant dense<0xFF800000> : vector<1x8xf32>
    %41 = vector.multi_reduction <maximumf>, %40, %cst_16 [2] : vector<1x8x8xf32> to vector<1x8xf32>
    %42 = vector.shape_cast %41 : vector<1x8xf32> to vector<1x8x1xf32>
    %43 = vector.broadcast %42 : vector<1x8x1xf32> to vector<1x8x8xf32>
    %44 = arith.subf %40, %43 : vector<1x8x8xf32>
    %45 = math.exp %44 : vector<1x8x8xf32>
    %cst_17 = arith.constant dense<0.000000e+00> : vector<1x8xf32>
    %46 = vector.multi_reduction <add>, %45, %cst_17 [2] : vector<1x8x8xf32> to vector<1x8xf32>
    %47 = vector.shape_cast %46 : vector<1x8xf32> to vector<1x8x1xf32>
    %48 = tpu.reciprocal %47 {approx = true} : vector<1x8x1xf32> -> vector<1x8x1xf32>
    %49 = vector.broadcast %48 : vector<1x8x1xf32> to vector<1x8x8xf32>
    %50 = arith.mulf %45, %49 : vector<1x8x8xf32>
    "tpu.trace_start"() <{level = 10 : i32, message = "bqk,bkd->bqd"}> : () -> ()
    %cst_18 = arith.constant dense<0.000000e+00> : vector<1x8x8xf32>
    %51 = tpu.matmul %50, %39, %cst_18 {dimension_numbers = #tpu.dot_dimension_numbers<[2], [1], [1], [2], [0, 0, 0, 1, 1, 2], [0], [0]>} : vector<1x8x8xf32>, vector<1x8x8xf32>, vector<1x8x8xf32> -> vector<1x8x8xf32>
    "tpu.trace_stop"() : () -> ()
    %52 = vector.extract_strided_slice %32 {offsets = [0, 0, 8], sizes = [1, 8, 8], strides = [1, 1, 1]} : vector<1x8x32xf32> to vector<1x8x8xf32>
    %53 = vector.extract_strided_slice %34 {offsets = [0, 0, 8], sizes = [1, 8, 8], strides = [1, 1, 1]} : vector<1x8x32xf32> to vector<1x8x8xf32>
    %54 = vector.extract_strided_slice %36 {offsets = [0, 0, 8], sizes = [1, 8, 8], strides = [1, 1, 1]} : vector<1x8x32xf32> to vector<1x8x8xf32>
    "tpu.trace_start"() <{level = 10 : i32, message = "bqd,bkd->bqk"}> : () -> ()
    %cst_19 = arith.constant dense<0.000000e+00> : vector<1x8x8xf32>
    %55 = tpu.matmul %52, %53, %cst_19 {dimension_numbers = #tpu.dot_dimension_numbers<[2], [2], [1], [1], [0, 0, 0, 1, 1, 1], [0], [0]>} : vector<1x8x8xf32>, vector<1x8x8xf32>, vector<1x8x8xf32> -> vector<1x8x8xf32>
    "tpu.trace_stop"() : () -> ()
    %cst_20 = arith.constant dense<0xFF800000> : vector<1x8xf32>
    %56 = vector.multi_reduction <maximumf>, %55, %cst_20 [2] : vector<1x8x8xf32> to vector<1x8xf32>
    %57 = vector.shape_cast %56 : vector<1x8xf32> to vector<1x8x1xf32>
    %58 = vector.broadcast %57 : vector<1x8x1xf32> to vector<1x8x8xf32>
    %59 = arith.subf %55, %58 : vector<1x8x8xf32>
    %60 = math.exp %59 : vector<1x8x8xf32>
    %cst_21 = arith.constant dense<0.000000e+00> : vector<1x8xf32>
    %61 = vector.multi_reduction <add>, %60, %cst_21 [2] : vector<1x8x8xf32> to vector<1x8xf32>
    %62 = vector.shape_cast %61 : vector<1x8xf32> to vector<1x8x1xf32>
    %63 = tpu.reciprocal %62 {approx = true} : vector<1x8x1xf32> -> vector<1x8x1xf32>
    %64 = vector.broadcast %63 : vector<1x8x1xf32> to vector<1x8x8xf32>
    %65 = arith.mulf %60, %64 : vector<1x8x8xf32>
    "tpu.trace_start"() <{level = 10 : i32, message = "bqk,bkd->bqd"}> : () -> ()
    %cst_22 = arith.constant dense<0.000000e+00> : vector<1x8x8xf32>
    %66 = tpu.matmul %65, %54, %cst_22 {dimension_numbers = #tpu.dot_dimension_numbers<[2], [1], [1], [2], [0, 0, 0, 1, 1, 2], [0], [0]>} : vector<1x8x8xf32>, vector<1x8x8xf32>, vector<1x8x8xf32> -> vector<1x8x8xf32>
    "tpu.trace_stop"() : () -> ()
    %67 = vector.extract_strided_slice %32 {offsets = [0, 0, 16], sizes = [1, 8, 8], strides = [1, 1, 1]} : vector<1x8x32xf32> to vector<1x8x8xf32>
    %68 = vector.extract_strided_slice %34 {offsets = [0, 0, 16], sizes = [1, 8, 8], strides = [1, 1, 1]} : vector<1x8x32xf32> to vector<1x8x8xf32>
    %69 = vector.extract_strided_slice %36 {offsets = [0, 0, 16], sizes = [1, 8, 8], strides = [1, 1, 1]} : vector<1x8x32xf32> to vector<1x8x8xf32>
    "tpu.trace_start"() <{level = 10 : i32, message = "bqd,bkd->bqk"}> : () -> ()
    %cst_23 = arith.constant dense<0.000000e+00> : vector<1x8x8xf32>
    %70 = tpu.matmul %67, %68, %cst_23 {dimension_numbers = #tpu.dot_dimension_numbers<[2], [2], [1], [1], [0, 0, 0, 1, 1, 1], [0], [0]>} : vector<1x8x8xf32>, vector<1x8x8xf32>, vector<1x8x8xf32> -> vector<1x8x8xf32>
    "tpu.trace_stop"() : () -> ()
    %cst_24 = arith.constant dense<0xFF800000> : vector<1x8xf32>
    %71 = vector.multi_reduction <maximumf>, %70, %cst_24 [2] : vector<1x8x8xf32> to vector<1x8xf32>
    %72 = vector.shape_cast %71 : vector<1x8xf32> to vector<1x8x1xf32>
    %73 = vector.broadcast %72 : vector<1x8x1xf32> to vector<1x8x8xf32>
    %74 = arith.subf %70, %73 : vector<1x8x8xf32>
    %75 = math.exp %74 : vector<1x8x8xf32>
    %cst_25 = arith.constant dense<0.000000e+00> : vector<1x8xf32>
    %76 = vector.multi_reduction <add>, %75, %cst_25 [2] : vector<1x8x8xf32> to vector<1x8xf32>
    %77 = vector.shape_cast %76 : vector<1x8xf32> to vector<1x8x1xf32>
    %78 = tpu.reciprocal %77 {approx = true} : vector<1x8x1xf32> -> vector<1x8x1xf32>
    %79 = vector.broadcast %78 : vector<1x8x1xf32> to vector<1x8x8xf32>
    %80 = arith.mulf %75, %79 : vector<1x8x8xf32>
    "tpu.trace_start"() <{level = 10 : i32, message = "bqk,bkd->bqd"}> : () -> ()
    %cst_26 = arith.constant dense<0.000000e+00> : vector<1x8x8xf32>
    %81 = tpu.matmul %80, %69, %cst_26 {dimension_numbers = #tpu.dot_dimension_numbers<[2], [1], [1], [2], [0, 0, 0, 1, 1, 2], [0], [0]>} : vector<1x8x8xf32>, vector<1x8x8xf32>, vector<1x8x8xf32> -> vector<1x8x8xf32>
    "tpu.trace_stop"() : () -> ()
    %82 = vector.extract_strided_slice %32 {offsets = [0, 0, 24], sizes = [1, 8, 8], strides = [1, 1, 1]} : vector<1x8x32xf32> to vector<1x8x8xf32>
    %83 = vector.extract_strided_slice %34 {offsets = [0, 0, 24], sizes = [1, 8, 8], strides = [1, 1, 1]} : vector<1x8x32xf32> to vector<1x8x8xf32>
    %84 = vector.extract_strided_slice %36 {offsets = [0, 0, 24], sizes = [1, 8, 8], strides = [1, 1, 1]} : vector<1x8x32xf32> to vector<1x8x8xf32>
    "tpu.trace_start"() <{level = 10 : i32, message = "bqd,bkd->bqk"}> : () -> ()
    %cst_27 = arith.constant dense<0.000000e+00> : vector<1x8x8xf32>
    %85 = tpu.matmul %82, %83, %cst_27 {dimension_numbers = #tpu.dot_dimension_numbers<[2], [2], [1], [1], [0, 0, 0, 1, 1, 1], [0], [0]>} : vector<1x8x8xf32>, vector<1x8x8xf32>, vector<1x8x8xf32> -> vector<1x8x8xf32>
    "tpu.trace_stop"() : () -> ()
    %cst_28 = arith.constant dense<0xFF800000> : vector<1x8xf32>
    %86 = vector.multi_reduction <maximumf>, %85, %cst_28 [2] : vector<1x8x8xf32> to vector<1x8xf32>
    %87 = vector.shape_cast %86 : vector<1x8xf32> to vector<1x8x1xf32>
    %88 = vector.broadcast %87 : vector<1x8x1xf32> to vector<1x8x8xf32>
    %89 = arith.subf %85, %88 : vector<1x8x8xf32>
    %90 = math.exp %89 : vector<1x8x8xf32>
    %cst_29 = arith.constant dense<0.000000e+00> : vector<1x8xf32>
    %91 = vector.multi_reduction <add>, %90, %cst_29 [2] : vector<1x8x8xf32> to vector<1x8xf32>
    %92 = vector.shape_cast %91 : vector<1x8xf32> to vector<1x8x1xf32>
    %93 = tpu.reciprocal %92 {approx = true} : vector<1x8x1xf32> -> vector<1x8x1xf32>
    %94 = vector.broadcast %93 : vector<1x8x1xf32> to vector<1x8x8xf32>
    %95 = arith.mulf %90, %94 : vector<1x8x8xf32>
    "tpu.trace_start"() <{level = 10 : i32, message = "bqk,bkd->bqd"}> : () -> ()
    %cst_30 = arith.constant dense<0.000000e+00> : vector<1x8x8xf32>
    %96 = tpu.matmul %95, %84, %cst_30 {dimension_numbers = #tpu.dot_dimension_numbers<[2], [1], [1], [2], [0, 0, 0, 1, 1, 2], [0], [0]>} : vector<1x8x8xf32>, vector<1x8x8xf32>, vector<1x8x8xf32> -> vector<1x8x8xf32>
    "tpu.trace_stop"() : () -> ()
    %97 = tpu.concatenate %51, %66, %81, %96 in 2 : vector<1x8x8xf32>, vector<1x8x8xf32>, vector<1x8x8xf32>, vector<1x8x8xf32> -> vector<1x8x32xf32>
    %98 = vector.shape_cast %97 : vector<1x8x32xf32> to vector<8x32xf32>
    %c0_31 = arith.constant 0 : index
    %c0_32 = arith.constant 0 : index
    %99 = vector.load %arg15[%c0_31, %c0_32] : memref<8x32xf32, #tpu.memory_space<vmem>>, vector<8x32xf32>
    tpu.vector_store %arg15[%c0_31, %c0_32], %98 {strides = array<i32>} : memref<8x32xf32, #tpu.memory_space<vmem>>, vector<8x32xf32>,
    %c0_33 = arith.constant 0 : index
    %c0_34 = arith.constant 0 : index
    %100 = vector.load %arg15[%c0_33, %c0_34] : memref<8x32xf32, #tpu.memory_space<vmem>>, vector<8x32xf32>
    %c0_35 = arith.constant 0 : index
    %c0_36 = arith.constant 0 : index
    %101 = vector.load %arg6[%c0_35, %c0_36] : memref<32x32xf32, #tpu.memory_space<vmem>>, vector<32x32xf32>
    %cst_37 = arith.constant dense<0.000000e+00> : vector<8x32xf32>
    %102 = tpu.matmul %100, %101, %cst_37 {dimension_numbers = #tpu.dot_dimension_numbers<[1], [0], [0], [1], [0, 0, 1, 1], [], []>} : vector<8x32xf32>, vector<32x32xf32>, vector<8x32xf32> -> vector<8x32xf32>
    %c0_38 = arith.constant 0 : index
    %c0_39 = arith.constant 0 : index
    %103 = vector.load %arg7[%c0_38, %c0_39] : memref<1x32xf32, #tpu.memory_space<vmem>>, vector<1x32xf32>
    %104 = vector.broadcast %103 : vector<1x32xf32> to vector<8x32xf32>
    %105 = arith.addf %102, %104 : vector<8x32xf32>
    %106 = arith.addf %1, %105 : vector<8x32xf32>
    %c0_40 = arith.constant 0 : index
    %c0_41 = arith.constant 0 : index
    %107 = vector.load %arg8[%c0_40, %c0_41] : memref<1x32xf32, #tpu.memory_space<vmem>>, vector<1x32xf32>
    %c0_42 = arith.constant 0 : index
    %c0_43 = arith.constant 0 : index
    %108 = vector.load %arg9[%c0_42, %c0_43] : memref<1x32xf32, #tpu.memory_space<vmem>>, vector<1x32xf32>
    %cst_44 = arith.constant dense<0.000000e+00> : vector<8xf32>
    %109 = vector.multi_reduction <add>, %106, %cst_44 [1] : vector<8x32xf32> to vector<8xf32>
    %110 = vector.shape_cast %109 : vector<8xf32> to vector<8x1xf32>
    %cst_45 = arith.constant 3.200000e+01 : f32
    %111 = vector.broadcast %cst_45 : f32 to vector<8x1xf32>
    %112 = arith.divf %110, %111 : vector<8x1xf32>
    %113 = vector.broadcast %112 : vector<8x1xf32> to vector<8x32xf32>
    %114 = arith.subf %106, %113 : vector<8x32xf32>
    %115 = arith.mulf %114, %114 : vector<8x32xf32>
    %cst_46 = arith.constant dense<0.000000e+00> : vector<8xf32>
    %116 = vector.multi_reduction <add>, %115, %cst_46 [1] : vector<8x32xf32> to vector<8xf32>
    %117 = vector.shape_cast %116 : vector<8xf32> to vector<8x1xf32>
    %cst_47 = arith.constant 3.200000e+01 : f32
    %118 = vector.broadcast %cst_47 : f32 to vector<8x1xf32>
    %119 = arith.divf %117, %118 : vector<8x1xf32>
    %120 = vector.broadcast %112 : vector<8x1xf32> to vector<8x32xf32>
    %121 = arith.subf %106, %120 : vector<8x32xf32>
    %cst_48 = arith.constant 9.99999974E-6 : f32
    %122 = vector.broadcast %cst_48 : f32 to vector<8x1xf32>
    %123 = arith.addf %119, %122 : vector<8x1xf32>
    %124 = math.rsqrt %123 : vector<8x1xf32>
    %125 = vector.broadcast %124 : vector<8x1xf32> to vector<8x32xf32>
    %126 = arith.mulf %121, %125 : vector<8x32xf32>
    %127 = vector.broadcast %107 : vector<1x32xf32> to vector<8x32xf32>
    %128 = arith.mulf %126, %127 : vector<8x32xf32>
    %129 = vector.broadcast %108 : vector<1x32xf32> to vector<8x32xf32>
    %130 = arith.addf %128, %129 : vector<8x32xf32>
    %c0_49 = arith.constant 0 : index
    %c0_50 = arith.constant 0 : index
    %131 = vector.load %arg13[%c0_49, %c0_50] : memref<1x32xf32, #tpu.memory_space<vmem>>, vector<1x32xf32>
    %132 = vector.broadcast %131 : vector<1x32xf32> to vector<8x32xf32>
    %133 = arith.addf %106, %132 : vector<8x32xf32>
    %c0_51 = arith.constant 0 : index
    %c0_52 = arith.constant 0 : index
    %134 = vector.load %arg10[%c0_51, %c0_52] : memref<32x128xf32, #tpu.memory_space<vmem>>, vector<32x128xf32>
    %cst_53 = arith.constant dense<0.000000e+00> : vector<8x128xf32>
    %135 = tpu.matmul %130, %134, %cst_53 {dimension_numbers = #tpu.dot_dimension_numbers<[1], [0], [0], [1], [0, 0, 1, 1], [], []>} : vector<8x32xf32>, vector<32x128xf32>, vector<8x128xf32> -> vector<8x128xf32>
    %c0_54 = arith.constant 0 : index
    %c0_55 = arith.constant 0 : index
    %136 = vector.load %arg11[%c0_54, %c0_55] : memref<1x128xf32, #tpu.memory_space<vmem>>, vector<1x128xf32>
    %137 = vector.broadcast %136 : vector<1x128xf32> to vector<8x128xf32>
    %138 = arith.addf %135, %137 : vector<8x128xf32>
    %cst_56 = arith.constant 1.702000e+00 : f32
    %139 = vector.broadcast %cst_56 : f32 to vector<8x128xf32>
    %140 = arith.mulf %139, %138 : vector<8x128xf32>
    %141 = arith.negf %140 : vector<8x128xf32>
    %142 = math.exp %141 : vector<8x128xf32>
    %cst_57 = arith.constant 1.000000e+00 : f32
    %143 = vector.broadcast %cst_57 : f32 to vector<8x128xf32>
    %144 = arith.addf %143, %142 : vector<8x128xf32>
    %145 = arith.divf %143, %144 : vector<8x128xf32>
    %146 = arith.mulf %138, %145 : vector<8x128xf32>
    %c0_58 = arith.constant 0 : index
    %c0_59 = arith.constant 0 : index
    %147 = vector.load %arg12[%c0_58, %c0_59] : memref<128x32xf32, #tpu.memory_space<vmem>>, vector<128x32xf32>
    %cst_60 = arith.constant dense<0.000000e+00> : vector<8x32xf32>
    %148 = tpu.matmul %146, %147, %cst_60 {dimension_numbers = #tpu.dot_dimension_numbers<[1], [0], [0], [1], [0, 0, 1, 1], [], []>} : vector<8x128xf32>, vector<128x32xf32>, vector<8x32xf32> -> vector<8x32xf32>
    %149 = arith.addf %133, %148 : vector<8x32xf32>
    %150 = vector.shape_cast %149 : vector<8x32xf32> to vector<1x8x32xf32>
    %c0_61 = arith.constant 0 : index
    %c0_62 = arith.constant 0 : index
    %c0_63 = arith.constant 0 : index
    %151 = vector.load %arg14[%c0_61, %c0_62, %c0_63] : memref<1x8x32xf32, #tpu.memory_space<vmem>>, vector<1x8x32xf32>
    tpu.vector_store %arg14[%c0_61, %c0_62, %c0_63], %150 {strides = array<i32>} : memref<1x8x32xf32, #tpu.memory_space<vmem>>, vector<1x8x32xf32>,
    return
  }
  func.func @transform_0(%arg0: i32) -> (i32, i32, i32) {
    %c0_i32 = arith.constant 0 : i32
    %c0_i32_0 = arith.constant 0 : i32
    %c0_i32_1 = arith.constant 0 : i32
    return %arg0, %c0_i32, %c0_i32_0 : i32, i32, i32
  }
  func.func @transform_1(%arg0: i32) -> (i32, i32) {
    %c0_i32 = arith.constant 0 : i32
    %c0_i32_0 = arith.constant 0 : i32
    %c0_i32_1 = arith.constant 0 : i32
    return %c0_i32, %c0_i32_0 : i32, i32
  }
  func.func @transform_2(%arg0: i32) -> (i32, i32) {
    %c0_i32 = arith.constant 0 : i32
    %c0_i32_0 = arith.constant 0 : i32
    %c0_i32_1 = arith.constant 0 : i32
    return %c0_i32, %c0_i32_0 : i32, i32
  }
  func.func @transform_3(%arg0: i32) -> (i32, i32) {
    %c0_i32 = arith.constant 0 : i32
    %c0_i32_0 = arith.constant 0 : i32
    %c0_i32_1 = arith.constant 0 : i32
    return %c0_i32, %c0_i32_0 : i32, i32
  }
  func.func @transform_4(%arg0: i32) -> (i32, i32) {
    %c0_i32 = arith.constant 0 : i32
    %c0_i32_0 = arith.constant 0 : i32
    %c0_i32_1 = arith.constant 0 : i32
    return %c0_i32, %c0_i32_0 : i32, i32
  }
  func.func @transform_5(%arg0: i32) -> (i32, i32) {
    %c0_i32 = arith.constant 0 : i32
    %c0_i32_0 = arith.constant 0 : i32
    %c0_i32_1 = arith.constant 0 : i32
    return %c0_i32, %c0_i32_0 : i32, i32
  }
  func.func @transform_6(%arg0: i32) -> (i32, i32) {
    %c0_i32 = arith.constant 0 : i32
    %c0_i32_0 = arith.constant 0 : i32
    %c0_i32_1 = arith.constant 0 : i32
    return %c0_i32, %c0_i32_0 : i32, i32
  }
  func.func @transform_7(%arg0: i32) -> (i32, i32) {
    %c0_i32 = arith.constant 0 : i32
    %c0_i32_0 = arith.constant 0 : i32
    %c0_i32_1 = arith.constant 0 : i32
    return %c0_i32, %c0_i32_0 : i32, i32
  }
  func.func @transform_8(%arg0: i32) -> (i32, i32) {
    %c0_i32 = arith.constant 0 : i32
    %c0_i32_0 = arith.constant 0 : i32
    %c0_i32_1 = arith.constant 0 : i32
    return %c0_i32, %c0_i32_0 : i32, i32
  }
  func.func @transform_9(%arg0: i32) -> (i32, i32) {
    %c0_i32 = arith.constant 0 : i32
    %c0_i32_0 = arith.constant 0 : i32
    %c0_i32_1 = arith.constant 0 : i32
    return %c0_i32, %c0_i32_0 : i32, i32
  }
  func.func @transform_10(%arg0: i32) -> (i32, i32) {
    %c0_i32 = arith.constant 0 : i32
    %c0_i32_0 = arith.constant 0 : i32
    %c0_i32_1 = arith.constant 0 : i32
    return %c0_i32, %c0_i32_0 : i32, i32
  }
  func.func @transform_11(%arg0: i32) -> (i32, i32) {
    %c0_i32 = arith.constant 0 : i32
    %c0_i32_0 = arith.constant 0 : i32
    %c0_i32_1 = arith.constant 0 : i32
    return %c0_i32, %c0_i32_0 : i32, i32
  }
  func.func @transform_12(%arg0: i32) -> (i32, i32) {
    %c0_i32 = arith.constant 0 : i32
    %c0_i32_0 = arith.constant 0 : i32
    %c0_i32_1 = arith.constant 0 : i32
    return %c0_i32, %c0_i32_0 : i32, i32
  }
  func.func @transform_13(%arg0: i32) -> (i32, i32, i32) {
    %c0_i32 = arith.constant 0 : i32
    %c0_i32_0 = arith.constant 0 : i32
    %c0_i32_1 = arith.constant 0 : i32
    return %arg0, %c0_i32, %c0_i32_0 : i32, i32, i32
  }
}

</mosaic_0001>

<llo_original>
// kernel: tpu_custom_call.1
$region0: #{tpu_custom_call.1}
  #allocation0 [shape = 'u32[]', space=smem, size = 0x4, offset = 0x4, fixed_abs, tag = 'smem constant byte address 0x4 - core index']
  #allocation1 [shape = 'u32[144,128]{1,0:T(1,128)}', space=vmem, size = 0x12000, scoped, tag = 'internal scratch']
  #allocation2 [shape = 'f32[8,32]{1,0:T(8,128)}', space=vmem, size = 0x1000, scoped, tag = 'scratch operand']
  %s0 = inlined_call_operand.vmem [shape: f32[2,8,32], index: 0, kind: input, shape index: {}]
  %s1 = inlined_call_operand.vmem [shape: f32[1,32], index: 1, kind: input, shape index: {}]
  %s2 = inlined_call_operand.vmem [shape: f32[1,32], index: 2, kind: input, shape index: {}]
  %s3 = inlined_call_operand.vmem [shape: f32[32,96], index: 3, kind: input, shape index: {}]
  %s4 = inlined_call_operand.vmem [shape: f32[1,96], index: 4, kind: input, shape index: {}]
  %s5 = inlined_call_operand.vmem [shape: f32[32,32], index: 5, kind: input, shape index: {}]
  %s6 = inlined_call_operand.vmem [shape: f32[1,32], index: 6, kind: input, shape index: {}]
  %s7 = inlined_call_operand.vmem [shape: f32[1,32], index: 7, kind: input, shape index: {}]
  %s8 = inlined_call_operand.vmem [shape: f32[1,32], index: 8, kind: input, shape index: {}]
  %s9 = inlined_call_operand.vmem [shape: f32[32,128], index: 9, kind: input, shape index: {}]
  %s10 = inlined_call_operand.vmem [shape: f32[1,128], index: 10, kind: input, shape index: {}]
  %s11 = inlined_call_operand.vmem [shape: f32[128,32], index: 11, kind: input, shape index: {}]
  %s12 = inlined_call_operand.vmem [shape: f32[1,32], index: 12, kind: input, shape index: {}]
  %s13 = inlined_call_operand.hbm [shape: f32[2,8,32], index: 13, kind: output, shape index: {}]
  %s14 = sld [smem:[#allocation0]]
  $region85: #{tpu_custom_call.1} parent=0
    _
  %s16 = ssub.s32 1, %s14
  %s17 = scalar_select 0, %s16, %s14
  $region1: #{tpu_custom_call.1} parent=0
    #allocation3 [shape = 'u8[8192]{0}', space=vmem, size = 0x2000, scoped, tag = 'output window, operand 0']
    #allocation4 [shape = 's32[2]{0}', space=sflag, size = 0x8, scoped, tag = 'scoped memory for tpu_custom_call.1']
    %18 = vsyncpa [#allocation4], 0
    %s19 = scalar_lea.sflag [#allocation4], 1
    %20 = vsyncpa %s19, 0
    loop: start=0, step=1, limit=4
    $region2: #{tpu_custom_call.1} parent=1 // loop_pre_header
      _
    $region3: #{tpu_custom_call.1} parent=1 // loop_header
      %s22 = sphi 0, %s26
      %p23 = scmp.ge.s32.totalorder %s22, 4
      %s32 = sphi 0, %s34
      %s35 = sphi 0, %s32
      %s36 = sphi 0, %s35
      %s52 = sphi 0, %s36
      %s56 = sphi 0, %s56
      %s58 = sphi 0, %s56
      %s59 = sphi 0, %s58
      %s73 = sphi 0, %s59
      %s77 = sphi 0, %s77
      %s79 = sphi 0, %s77
      %s80 = sphi 0, %s79
      %s94 = sphi 0, %s80
      %s98 = sphi 0, %s98
      %s100 = sphi 0, %s98
      %s101 = sphi 0, %s100
      %s115 = sphi 0, %s101
      %s119 = sphi 0, %s119
      %s121 = sphi 0, %s119
      %s122 = sphi 0, %s121
      %s136 = sphi 0, %s122
      %s140 = sphi 0, %s140
      %s142 = sphi 0, %s140
      %s143 = sphi 0, %s142
      %s157 = sphi 0, %s143
      %s161 = sphi 0, %s161
      %s163 = sphi 0, %s161
      %s164 = sphi 0, %s163
      %s178 = sphi 0, %s164
      %s182 = sphi 0, %s182
      %s184 = sphi 0, %s182
      %s185 = sphi 0, %s184
      %s199 = sphi 0, %s185
      %s203 = sphi 0, %s203
      %s205 = sphi 0, %s203
      %s206 = sphi 0, %s205
      %s220 = sphi 0, %s206
      %s224 = sphi 0, %s224
      %s226 = sphi 0, %s224
      %s227 = sphi 0, %s226
      %s241 = sphi 0, %s227
      %s245 = sphi 0, %s245
      %s247 = sphi 0, %s245
      %s248 = sphi 0, %s247
      %s262 = sphi 0, %s248
      %s266 = sphi 0, %s266
      %s268 = sphi 0, %s266
      %s269 = sphi 0, %s268
      %s283 = sphi 0, %s269
      %s287 = sphi 0, %s287
      %s289 = sphi 0, %s287
      %s290 = sphi 0, %s289
      %s304 = sphi 0, %s290
      %s310 = sphi 0, %s312
      %s313 = sphi 0, %s310
      %s314 = sphi 0, %s313
      %s330 = sphi 0, %s314
    $region4: #{tpu_custom_call.1} parent=1 // loop_header_branch
      %25 = sbr.rel (%p23) target = $region8
    $region5: #{tpu_custom_call.1} parent=1 // loop_body
      %s27 = ssub.s32 %s22, 1
      %s28 = ssub.s32 %s22, 2
      %s29 = sadd.s32 %s22, 1
      %s30 = ssub.s32 %s22, %s29
      %p31 = scmp.eq.s32.totalorder %s30, 0
      %s33 = sadd.s32 %s32, 1
      %s34 = scalar_select %p31, %s32, %s33
      %p37 = pneg %p31
      %p38 = scmp.eq.s32.totalorder %s22, 1
      %p39 = por %p37, %p38
      %p40 = scmp.ne.s32.totalorder %s32, %s35
      %p41 = scmp.eq.s32.totalorder %s22, 0
      %p42 = por %p40, %p41
      %p43 = scmp.ne.s32.totalorder %s32, %s35
      %p44 = scmp.eq.s32.totalorder %s27, 1
      %p45 = por %p43, %p44
      %p46 = scmp.ne.s32.totalorder %s35, %s36
      %p47 = scmp.eq.s32.totalorder %s27, 0
      %p48 = por %p46, %p47
      %p49 = scmp.ne.s32.totalorder %s35, %s36
      %p50 = scmp.eq.s32.totalorder %s28, 1
      %p51 = por %p49, %p50
      %p53 = scmp.ne.s32.totalorder %s36, %s52
      %p54 = scmp.eq.s32.totalorder %s28, 0
      %p55 = por %p53, %p54
      %s57 = sadd.s32 %s56, 1
      %p60 = scmp.eq.s32.totalorder %s22, 1
      %p61 = scmp.ne.s32.totalorder %s56, %s58
      %p62 = scmp.eq.s32.totalorder %s22, 0
      %p63 = por %p61, %p62
      %p64 = scmp.ne.s32.totalorder %s56, %s58
      %p65 = scmp.eq.s32.totalorder %s27, 1
      %p66 = por %p64, %p65
      %p67 = scmp.ne.s32.totalorder %s58, %s59
      %p68 = scmp.eq.s32.totalorder %s27, 0
      %p69 = por %p67, %p68
      %p70 = scmp.ne.s32.totalorder %s58, %s59
      %p71 = scmp.eq.s32.totalorder %s28, 1
      %p72 = por %p70, %p71
      %p74 = scmp.ne.s32.totalorder %s59, %s73
      %p75 = scmp.eq.s32.totalorder %s28, 0
      %p76 = por %p74, %p75
      %s78 = sadd.s32 %s77, 1
      %p81 = scmp.eq.s32.totalorder %s22, 1
      %p82 = scmp.ne.s32.totalorder %s77, %s79
      %p83 = scmp.eq.s32.totalorder %s22, 0
      %p84 = por %p82, %p83
      %p85 = scmp.ne.s32.totalorder %s77, %s79
      %p86 = scmp.eq.s32.totalorder %s27, 1
      %p87 = por %p85, %p86
      %p88 = scmp.ne.s32.totalorder %s79, %s80
      %p89 = scmp.eq.s32.totalorder %s27, 0
      %p90 = por %p88, %p89
      %p91 = scmp.ne.s32.totalorder %s79, %s80
      %p92 = scmp.eq.s32.totalorder %s28, 1
      %p93 = por %p91, %p92
      %p95 = scmp.ne.s32.totalorder %s80, %s94
      %p96 = scmp.eq.s32.totalorder %s28, 0
      %p97 = por %p95, %p96
      %s99 = sadd.s32 %s98, 1
      %p102 = scmp.eq.s32.totalorder %s22, 1
      %p103 = scmp.ne.s32.totalorder %s98, %s100
      %p104 = scmp.eq.s32.totalorder %s22, 0
      %p105 = por %p103, %p104
      %p106 = scmp.ne.s32.totalorder %s98, %s100
      %p107 = scmp.eq.s32.totalorder %s27, 1
      %p108 = por %p106, %p107
      %p109 = scmp.ne.s32.totalorder %s100, %s101
      %p110 = scmp.eq.s32.totalorder %s27, 0
      %p111 = por %p109, %p110
      %p112 = scmp.ne.s32.totalorder %s100, %s101
      %p113 = scmp.eq.s32.totalorder %s28, 1
      %p114 = por %p112, %p113
      %p116 = scmp.ne.s32.totalorder %s101, %s115
      %p117 = scmp.eq.s32.totalorder %s28, 0
      %p118 = por %p116, %p117
      %s120 = sadd.s32 %s119, 1
      %p123 = scmp.eq.s32.totalorder %s22, 1
      %p124 = scmp.ne.s32.totalorder %s119, %s121
      %p125 = scmp.eq.s32.totalorder %s22, 0
      %p126 = por %p124, %p125
      %p127 = scmp.ne.s32.totalorder %s119, %s121
      %p128 = scmp.eq.s32.totalorder %s27, 1
      %p129 = por %p127, %p128
      %p130 = scmp.ne.s32.totalorder %s121, %s122
      %p131 = scmp.eq.s32.totalorder %s27, 0
      %p132 = por %p130, %p131
      %p133 = scmp.ne.s32.totalorder %s121, %s122
      %p134 = scmp.eq.s32.totalorder %s28, 1
      %p135 = por %p133, %p134
      %p137 = scmp.ne.s32.totalorder %s122, %s136
      %p138 = scmp.eq.s32.totalorder %s28, 0
      %p139 = por %p137, %p138
      %s141 = sadd.s32 %s140, 1
      %p144 = scmp.eq.s32.totalorder %s22, 1
      %p145 = scmp.ne.s32.totalorder %s140, %s142
      %p146 = scmp.eq.s32.totalorder %s22, 0
      %p147 = por %p145, %p146
      %p148 = scmp.ne.s32.totalorder %s140, %s142
      %p149 = scmp.eq.s32.totalorder %s27, 1
      %p150 = por %p148, %p149
      %p151 = scmp.ne.s32.totalorder %s142, %s143
      %p152 = scmp.eq.s32.totalorder %s27, 0
      %p153 = por %p151, %p152
      %p154 = scmp.ne.s32.totalorder %s142, %s143
      %p155 = scmp.eq.s32.totalorder %s28, 1
      %p156 = por %p154, %p155
      %p158 = scmp.ne.s32.totalorder %s143, %s157
      %p159 = scmp.eq.s32.totalorder %s28, 0
      %p160 = por %p158, %p159
      %s162 = sadd.s32 %s161, 1
      %p165 = scmp.eq.s32.totalorder %s22, 1
      %p166 = scmp.ne.s32.totalorder %s161, %s163
      %p167 = scmp.eq.s32.totalorder %s22, 0
      %p168 = por %p166, %p167
      %p169 = scmp.ne.s32.totalorder %s161, %s163
      %p170 = scmp.eq.s32.totalorder %s27, 1
      %p171 = por %p169, %p170
      %p172 = scmp.ne.s32.totalorder %s163, %s164
      %p173 = scmp.eq.s32.totalorder %s27, 0
      %p174 = por %p172, %p173
      %p175 = scmp.ne.s32.totalorder %s163, %s164
      %p176 = scmp.eq.s32.totalorder %s28, 1
      %p177 = por %p175, %p176
      %p179 = scmp.ne.s32.totalorder %s164, %s178
      %p180 = scmp.eq.s32.totalorder %s28, 0
      %p181 = por %p179, %p180
      %s183 = sadd.s32 %s182, 1
      %p186 = scmp.eq.s32.totalorder %s22, 1
      %p187 = scmp.ne.s32.totalorder %s182, %s184
      %p188 = scmp.eq.s32.totalorder %s22, 0
      %p189 = por %p187, %p188
      %p190 = scmp.ne.s32.totalorder %s182, %s184
      %p191 = scmp.eq.s32.totalorder %s27, 1
      %p192 = por %p190, %p191
      %p193 = scmp.ne.s32.totalorder %s184, %s185
      %p194 = scmp.eq.s32.totalorder %s27, 0
      %p195 = por %p193, %p194
      %p196 = scmp.ne.s32.totalorder %s184, %s185
      %p197 = scmp.eq.s32.totalorder %s28, 1
      %p198 = por %p196, %p197
      %p200 = scmp.ne.s32.totalorder %s185, %s199
      %p201 = scmp.eq.s32.totalorder %s28, 0
      %p202 = por %p200, %p201
      %s204 = sadd.s32 %s203, 1
      %p207 = scmp.eq.s32.totalorder %s22, 1
      %p208 = scmp.ne.s32.totalorder %s203, %s205
      %p209 = scmp.eq.s32.totalorder %s22, 0
      %p210 = por %p208, %p209
      %p211 = scmp.ne.s32.totalorder %s203, %s205
      %p212 = scmp.eq.s32.totalorder %s27, 1
      %p213 = por %p211, %p212
      %p214 = scmp.ne.s32.totalorder %s205, %s206
      %p215 = scmp.eq.s32.totalorder %s27, 0
      %p216 = por %p214, %p215
      %p217 = scmp.ne.s32.totalorder %s205, %s206
      %p218 = scmp.eq.s32.totalorder %s28, 1
      %p219 = por %p217, %p218
      %p221 = scmp.ne.s32.totalorder %s206, %s220
      %p222 = scmp.eq.s32.totalorder %s28, 0
      %p223 = por %p221, %p222
      %s225 = sadd.s32 %s224, 1
      %p228 = scmp.eq.s32.totalorder %s22, 1
      %p229 = scmp.ne.s32.totalorder %s224, %s226
      %p230 = scmp.eq.s32.totalorder %s22, 0
      %p231 = por %p229, %p230
      %p232 = scmp.ne.s32.totalorder %s224, %s226
      %p233 = scmp.eq.s32.totalorder %s27, 1
      %p234 = por %p232, %p233
      %p235 = scmp.ne.s32.totalorder %s226, %s227
      %p236 = scmp.eq.s32.totalorder %s27, 0
      %p237 = por %p235, %p236
      %p238 = scmp.ne.s32.totalorder %s226, %s227
      %p239 = scmp.eq.s32.totalorder %s28, 1
      %p240 = por %p238, %p239
      %p242 = scmp.ne.s32.totalorder %s227, %s241
      %p243 = scmp.eq.s32.totalorder %s28, 0
      %p244 = por %p242, %p243
      %s246 = sadd.s32 %s245, 1
      %p249 = scmp.eq.s32.totalorder %s22, 1
      %p250 = scmp.ne.s32.totalorder %s245, %s247
      %p251 = scmp.eq.s32.totalorder %s22, 0
      %p252 = por %p250, %p251
      %p253 = scmp.ne.s32.totalorder %s245, %s247
      %p254 = scmp.eq.s32.totalorder %s27, 1
      %p255 = por %p253, %p254
      %p256 = scmp.ne.s32.totalorder %s247, %s248
      %p257 = scmp.eq.s32.totalorder %s27, 0
      %p258 = por %p256, %p257
      %p259 = scmp.ne.s32.totalorder %s247, %s248
      %p260 = scmp.eq.s32.totalorder %s28, 1
      %p261 = por %p259, %p260
      %p263 = scmp.ne.s32.totalorder %s248, %s262
      %p264 = scmp.eq.s32.totalorder %s28, 0
      %p265 = por %p263, %p264
      %s267 = sadd.s32 %s266, 1
      %p270 = scmp.eq.s32.totalorder %s22, 1
      %p271 = scmp.ne.s32.totalorder %s266, %s268
      %p272 = scmp.eq.s32.totalorder %s22, 0
      %p273 = por %p271, %p272
      %p274 = scmp.ne.s32.totalorder %s266, %s268
      %p275 = scmp.eq.s32.totalorder %s27, 1
      %p276 = por %p274, %p275
      %p277 = scmp.ne.s32.totalorder %s268, %s269
      %p278 = scmp.eq.s32.totalorder %s27, 0
      %p279 = por %p277, %p278
      %p280 = scmp.ne.s32.totalorder %s268, %s269
      %p281 = scmp.eq.s32.totalorder %s28, 1
      %p282 = por %p280, %p281
      %p284 = scmp.ne.s32.totalorder %s269, %s283
      %p285 = scmp.eq.s32.totalorder %s28, 0
      %p286 = por %p284, %p285
      %s288 = sadd.s32 %s287, 1
      %p291 = scmp.eq.s32.totalorder %s22, 1
      %p292 = scmp.ne.s32.totalorder %s287, %s289
      %p293 = scmp.eq.s32.totalorder %s22, 0
      %p294 = por %p292, %p293
      %p295 = scmp.ne.s32.totalorder %s287, %s289
      %p296 = scmp.eq.s32.totalorder %s27, 1
      %p297 = por %p295, %p296
      %p298 = scmp.ne.s32.totalorder %s289, %s290
      %p299 = scmp.eq.s32.totalorder %s27, 0
      %p300 = por %p298, %p299
      %p301 = scmp.ne.s32.totalorder %s289, %s290
      %p302 = scmp.eq.s32.totalorder %s28, 1
      %p303 = por %p301, %p302
      %p305 = scmp.ne.s32.totalorder %s290, %s304
      %p306 = scmp.eq.s32.totalorder %s28, 0
      %p307 = por %p305, %p306
      %s308 = ssub.s32 %s22, %s29
      %p309 = scmp.eq.s32.totalorder %s308, 0
      %s311 = sadd.s32 %s310, 1
      %s312 = scalar_select %p309, %s310, %s311
      %p315 = pneg %p309
      %p316 = scmp.eq.s32.totalorder %s22, 1
      %p317 = por %p315, %p316
      %p318 = scmp.ne.s32.totalorder %s310, %s313
      %p319 = scmp.eq.s32.totalorder %s22, 0
      %p320 = por %p318, %p319
      %p321 = scmp.ne.s32.totalorder %s310, %s313
      %p322 = scmp.eq.s32.totalorder %s27, 1
      %p323 = por %p321, %p322
      %p324 = scmp.ne.s32.totalorder %s313, %s314
      %p325 = scmp.eq.s32.totalorder %s27, 0
      %p326 = por %p324, %p325
      %p327 = scmp.ne.s32.totalorder %s313, %s314
      %p328 = scmp.eq.s32.totalorder %s28, 1
      %p329 = por %p327, %p328
      %p331 = scmp.ne.s32.totalorder %s314, %s330
      %p332 = scmp.eq.s32.totalorder %s28, 0
      %p333 = por %p331, %p332
      %p334 = scmp.le.s32.totalorder 1, %s22
      %p335 = scmp.lt.s32.totalorder %s22, 3
      %p336 = pnand %p334, %p335
      %p337 = pneg %p336
      // Predicated region
      $region9: #{tpu_custom_call.1} parent=5 // pred_check
        _
      $region10: #{tpu_custom_call.1} parent=5 // pred_check_branch
        %339 = sbr.rel (%p336) target = $region12
      $region11: #{tpu_custom_call.1} parent=5 // pred_region
        %s340 = ssub.s32 %s22, 1
        // Predicated region
        $region13: #{tpu_custom_call.1} parent=11 // pred_check
          %p341 = pneg %p69
        $region14: #{tpu_custom_call.1} parent=11 // pred_check_branch
          %343 = sbr.rel (%p341) target = $region16
        $region15: #{tpu_custom_call.1} parent=11 // pred_region
          _
        $region16: #{tpu_custom_call.1} parent=11 // pred_fallthru
          _
        // Predicated region
        $region17: #{tpu_custom_call.1} parent=11 // pred_check
          %p344 = pneg %p90
        $region18: #{tpu_custom_call.1} parent=11 // pred_check_branch
          %346 = sbr.rel (%p344) target = $region20
        $region19: #{tpu_custom_call.1} parent=11 // pred_region
          _
        $region20: #{tpu_custom_call.1} parent=11 // pred_fallthru
          _
        // Predicated region
        $region21: #{tpu_custom_call.1} parent=11 // pred_check
          %p347 = pneg %p111
        $region22: #{tpu_custom_call.1} parent=11 // pred_check_branch
          %349 = sbr.rel (%p347) target = $region24
        $region23: #{tpu_custom_call.1} parent=11 // pred_region
          _
        $region24: #{tpu_custom_call.1} parent=11 // pred_fallthru
          _
        // Predicated region
        $region25: #{tpu_custom_call.1} parent=11 // pred_check
          %p350 = pneg %p132
        $region26: #{tpu_custom_call.1} parent=11 // pred_check_branch
          %352 = sbr.rel (%p350) target = $region28
        $region27: #{tpu_custom_call.1} parent=11 // pred_region
          _
        $region28: #{tpu_custom_call.1} parent=11 // pred_fallthru
          _
        // Predicated region
        $region29: #{tpu_custom_call.1} parent=11 // pred_check
          %p353 = pneg %p153
        $region30: #{tpu_custom_call.1} parent=11 // pred_check_branch
          %355 = sbr.rel (%p353) target = $region32
        $region31: #{tpu_custom_call.1} parent=11 // pred_region
          _
        $region32: #{tpu_custom_call.1} parent=11 // pred_fallthru
          _
        // Predicated region
        $region33: #{tpu_custom_call.1} parent=11 // pred_check
          %p356 = pneg %p174
        $region34: #{tpu_custom_call.1} parent=11 // pred_check_branch
          %358 = sbr.rel (%p356) target = $region36
        $region35: #{tpu_custom_call.1} parent=11 // pred_region
          _
        $region36: #{tpu_custom_call.1} parent=11 // pred_fallthru
          _
        // Predicated region
        $region37: #{tpu_custom_call.1} parent=11 // pred_check
          %p359 = pneg %p195
        $region38: #{tpu_custom_call.1} parent=11 // pred_check_branch
          %361 = sbr.rel (%p359) target = $region40
        $region39: #{tpu_custom_call.1} parent=11 // pred_region
          _
        $region40: #{tpu_custom_call.1} parent=11 // pred_fallthru
          _
        // Predicated region
        $region41: #{tpu_custom_call.1} parent=11 // pred_check
          %p362 = pneg %p216
        $region42: #{tpu_custom_call.1} parent=11 // pred_check_branch
          %364 = sbr.rel (%p362) target = $region44
        $region43: #{tpu_custom_call.1} parent=11 // pred_region
          _
        $region44: #{tpu_custom_call.1} parent=11 // pred_fallthru
          _
        // Predicated region
        $region45: #{tpu_custom_call.1} parent=11 // pred_check
          %p365 = pneg %p237
        $region46: #{tpu_custom_call.1} parent=11 // pred_check_branch
          %367 = sbr.rel (%p365) target = $region48
        $region47: #{tpu_custom_call.1} parent=11 // pred_region
          _
        $region48: #{tpu_custom_call.1} parent=11 // pred_fallthru
          _
        // Predicated region
        $region49: #{tpu_custom_call.1} parent=11 // pred_check
          %p368 = pneg %p258
        $region50: #{tpu_custom_call.1} parent=11 // pred_check_branch
          %370 = sbr.rel (%p368) target = $region52
        $region51: #{tpu_custom_call.1} parent=11 // pred_region
          _
        $region52: #{tpu_custom_call.1} parent=11 // pred_fallthru
          _
        // Predicated region
        $region53: #{tpu_custom_call.1} parent=11 // pred_check
          %p371 = pneg %p279
        $region54: #{tpu_custom_call.1} parent=11 // pred_check_branch
          %373 = sbr.rel (%p371) target = $region56
        $region55: #{tpu_custom_call.1} parent=11 // pred_region
          _
        $region56: #{tpu_custom_call.1} parent=11 // pred_fallthru
          _
        // Predicated region
        $region57: #{tpu_custom_call.1} parent=11 // pred_check
          %p374 = pneg %p300
        $region58: #{tpu_custom_call.1} parent=11 // pred_check_branch
          %376 = sbr.rel (%p374) target = $region60
        $region59: #{tpu_custom_call.1} parent=11 // pred_region
          _
        $region60: #{tpu_custom_call.1} parent=11 // pred_fallthru
          _
      $region12: #{tpu_custom_call.1} parent=5 // pred_fallthru
        _
      %p377 = scmp.lt.s32.totalorder %s22, 2
      // Predicated region
      $region61: #{tpu_custom_call.1} parent=5 // pred_check
        %p378 = pneg %p377
      $region62: #{tpu_custom_call.1} parent=5 // pred_check_branch
        %380 = sbr.rel (%p378) target = $region64
      $region63: #{tpu_custom_call.1} parent=5 // pred_region
        // Predicated region
        $region65: #{tpu_custom_call.1} parent=63 // pred_check
          %p381 = pneg %p42
        $region66: #{tpu_custom_call.1} parent=63 // pred_check_branch
          %383 = sbr.rel (%p381) target = $region68
        $region67: #{tpu_custom_call.1} parent=63 // pred_region
          %p384 = scmp.lt.s32.totalorder %s22, 1
          %s385 = scalar_select %p384, %s22, 1
          %s386 = smul.addr %s385, 8
          %s387 = scalar_lea.vmem %s0, %s386
        $region68: #{tpu_custom_call.1} parent=63 // pred_fallthru
          _
      $region64: #{tpu_custom_call.1} parent=5 // pred_fallthru
        _
      %p388 = scmp.le.s32.totalorder 1, %s22
      %p389 = scmp.lt.s32.totalorder %s22, 3
      %p390 = pnand %p388, %p389
      %p391 = pneg %p390
      // Predicated region
      $region69: #{tpu_custom_call.1} parent=5 // pred_check
        _
      $region70: #{tpu_custom_call.1} parent=5 // pred_check_branch
        %393 = sbr.rel (%p390) target = $region72
      $region71: #{tpu_custom_call.1} parent=5 // pred_region
        %s394 = ssub.s32 %s22, 1
        %p395 = scmp.lt.s32.totalorder %s27, 1
        %s396 = scalar_select %p395, %s27, 1
        %s397 = smul.addr %s396, 8
        %s398 = scalar_lea.vmem %s0, %s397
        %p399 = pneg %p48
        %p400 = pneg %p45
        %p401 = pneg %p69
        %p402 = pneg %p66
        %p403 = pneg %p90
        %p404 = pneg %p87
        %p405 = pneg %p111
        %p406 = pneg %p108
        %p407 = pneg %p132
        %p408 = pneg %p129
        %p409 = pneg %p153
        %p410 = pneg %p150
        %p411 = pneg %p174
        %p412 = pneg %p171
        %p413 = pneg %p195
        %p414 = pneg %p192
        %p415 = pneg %p216
        %p416 = pneg %p213
        %p417 = pneg %p237
        %p418 = pneg %p234
        %p419 = pneg %p258
        %p420 = pneg %p255
        %p421 = pneg %p279
        %p422 = pneg %p276
        %p423 = pneg %p300
        %p424 = pneg %p297
        %p425 = pneg %p326
        %p426 = pneg %p323
        %s427 = sand.u32 %s313, 1
        %s428 = scalar_lea.sflag [#allocation4], %s427
        %s429 = sand.u32 %s313, 1
        %s430 = smul.addr %s429, 8
        %s431 = scalar_lea.vmem [#allocation3], %s430
        %p432 = scmp.lt.s32.totalorder %s27, 1
        %s433 = scalar_select %p432, %s27, 1
        %s434 = smul.addr %s433, 8
        %s435 = scalar_lea.vmem %s0, %s434
        %v436 = vld [vmem:[%s435] sm:$0xff]
        %v437 = vld [vmem:[%s1] sm:$0x1]
        %v438 = vld [vmem:[%s2] sm:$0x1]
        %vm439 = vcmask 261120
        %v440 = vsel %vm439, %v436, 0.0
        %441 = vadd.xlane.f32.xlu0 %v440
        %v442 = vpop.xlane.xlu0 %441
        %v443 = vrcp.pop 32.0
        %v444 = vmul.f32 %v442, %v443
        %v445 = vsub.f32 %v436, %v444
        %v446 = vmul.f32 %v445, %v445
        %v447 = vsel %vm439, %v446, 0.0
        %448 = vadd.xlane.f32.xlu0 %v447
        %v449 = vpop.xlane.xlu0 %448
        %v450 = vmul.f32 %v449, %v443
        %v451 = vadd.f32 %v450, 1e-05
        %v452 = vrsqrt.pop %v451
        %v453 = vmul.f32 %v445, %v452
        %v455 = vlaneseq
        %v456 = vshrl.u32 %v455, 7
        %v457 = vsub.s32 0, %v456
        %v458 = vrot.slane %v437, %v457
        %v460 = vmul.f32 %v453, %v458
        %v462 = vlaneseq
        %v463 = vshrl.u32 %v462, 7
        %v464 = vsub.s32 0, %v463
        %v465 = vrot.slane %v438, %v464
        %v467 = vadd.f32 %v460, %v465
        %v468 = vld [vmem:[%s3] sm:$0xff]
        %v469 = vld [vmem:[%s3 + $0x8] sm:$0xff]
        %v470 = vld [vmem:[%s3 + $0x10] sm:$0xff]
        %v471 = vld [vmem:[%s3 + $0x18] sm:$0xff]
        %v472 = vld [vmem:[%s4] sm:$0x1]
        %v474 = vlaneseq
        %v475 = vshrl.u32 %v474, 7
        %v476 = vsub.s32 0, %v475
        %v477 = vrot.slane %v472, %v476
        %v480 = vsel %vm439, %v467, 0
        %482 = vmatprep.subr.mxu0 0.0
        %483 = vmatpush1.msra.mxu0 %v468
        %484 = vmatprep.subr.mxu0 0.0
        %485 = vmatpush1.msra.mxu0 %v469
        %486 = vmatprep.subr.mxu0 0.0
        %487 = vmatpush1.msra.mxu0 %v470
        %488 = vmatprep.subr.mxu0 0.0
        %489 = vmatpush1.msra.mxu0 %v471
        %490 = vmatprep.subr.mxu0 0.0
        %491 = vmatpush1.msra.mxu0 0.0
        %492 = vmatprep.subr.mxu0 0.0
        %493 = vmatpush1.msra.mxu0 0.0
        %494 = vmatprep.subr.mxu0 0.0
        %495 = vmatpush1.msra.mxu0 0.0
        %496 = vmatprep.subr.mxu0 0.0
        %497 = vmatpush1.msra.mxu0 0.0
        %498 = vmatprep.subr.mxu0 0.0
        %499 = vmatpush1.msra.mxu0 0.0
        %500 = vmatprep.subr.mxu0 0.0
        %501 = vmatpush1.msra.mxu0 0.0
        %502 = vmatprep.subr.mxu0 0.0
        %503 = vmatpush1.msra.mxu0 0.0
        %504 = vmatprep.subr.mxu0 0.0
        %505 = vmatpush1.msra.mxu0 0.0
        %506 = vmatprep.subr.mxu0 0.0
        %507 = vmatpush1.msra.mxu0 0.0
        %508 = vmatprep.subr.mxu0 0.0
        %509 = vmatpush1.msra.mxu0 0.0
        %510 = vmatprep.subr.mxu0 0.0
        %511 = vmatpush1.msra.mxu0 0.0
        %512 = vmatprep.subr.mxu0 0.0
        %513 = vmatpush1.msra.mxu0 0.0
        %514 = vmatprep.subr.mxu0 0.0
        %515 = vmatpush1.msra.mxu0 0.0
        %516 = vmatprep.subr.mxu0 0.0
        %517 = vmatpush1.msra.mxu0 0.0
        %518 = vmatprep.subr.mxu0 0.0
        %519 = vmatpush1.msra.mxu0 0.0
        %520 = vmatprep.subr.mxu0 0.0
        %521 = vmatpush1.msra.mxu0 0.0
        %522 = vmatprep.subr.mxu0 0.0
        %523 = vmatpush1.msra.mxu0 0.0
        %524 = vmatprep.subr.mxu0 0.0
        %525 = vmatpush1.msra.mxu0 0.0
        %526 = vmatprep.subr.mxu0 0.0
        %527 = vmatpush1.msra.mxu0 0.0
        %528 = vmatprep.subr.mxu0 0.0
        %529 = vmatpush1.msra.mxu0 0.0
        %530 = vmatprep.subr.mxu0 0.0
        %531 = vmatpush1.msra.mxu0 0.0
        %532 = vmatprep.subr.mxu0 0.0
        %533 = vmatpush1.msra.mxu0 0.0
        %534 = vmatprep.subr.mxu0 0.0
        %535 = vmatpush1.msra.mxu0 0.0
        %536 = vmatprep.subr.mxu0 0.0
        %537 = vmatpush1.msra.mxu0 0.0
        %538 = vmatprep.subr.mxu0 0.0
        %539 = vmatpush1.msra.mxu0 0.0
        %540 = vmatprep.subr.mxu0 0.0
        %541 = vmatpush1.msra.mxu0 0.0
        %542 = vmatprep.subr.mxu0 0.0
        %543 = vmatpush1.msra.mxu0 0.0
        %544 = vmatprep.subr.mxu0 0.0
        %545 = vmatpush1.msra.mxu0 0.0
        %546 = vmatprep.mubr.f32.mxu0 0.0
        %547 = vmatmul.mubr.f32.gmra.mrb[0].mxu0 %v480
        %v548 = vpop.f32.mrb[0].mxu0
        %v549 = vadd.f32 %v477, %v548
        %v550 = vpop.f32.mrb[0].mxu0
        %551 = vdwg.mxu0
        %553 = vrot.lane.b32.xlu0 %v549, 96
        %v554 = vpop.permute.xlu0 %553
        %vm555 = vcmask 64512
        %v556 = vsel %vm555, %v549, 0
        %v558 = vsel %vm555, %v554, 0
        %560 = vmatprep.subr.mxu0 0.0
        %561 = vmatpush1.xpose.msra.mxu0 %v558
        %562 = vmatprep.subr.mxu0 0.0
        %563 = vmatpush1.xpose.msra.mxu0 0.0
        %564 = vmatprep.subr.mxu0 0.0
        %565 = vmatpush1.xpose.msra.mxu0 0.0
        %566 = vmatprep.subr.mxu0 0.0
        %567 = vmatpush1.xpose.msra.mxu0 0.0
        %568 = vmatprep.subr.mxu0 0.0
        %569 = vmatpush1.xpose.msra.mxu0 0.0
        %570 = vmatprep.subr.mxu0 0.0
        %571 = vmatpush1.xpose.msra.mxu0 0.0
        %572 = vmatprep.subr.mxu0 0.0
        %573 = vmatpush1.xpose.msra.mxu0 0.0
        %574 = vmatprep.subr.mxu0 0.0
        %575 = vmatpush1.xpose.msra.mxu0 0.0
        %576 = vmatprep.subr.mxu0 0.0
        %577 = vmatpush1.xpose.msra.mxu0 0.0
        %578 = vmatprep.subr.mxu0 0.0
        %579 = vmatpush1.xpose.msra.mxu0 0.0
        %580 = vmatprep.subr.mxu0 0.0
        %581 = vmatpush1.xpose.msra.mxu0 0.0
        %582 = vmatprep.subr.mxu0 0.0
        %583 = vmatpush1.xpose.msra.mxu0 0.0
        %584 = vmatprep.subr.mxu0 0.0
        %585 = vmatpush1.xpose.msra.mxu0 0.0
        %586 = vmatprep.subr.mxu0 0.0
        %587 = vmatpush1.xpose.msra.mxu0 0.0
        %588 = vmatprep.subr.mxu0 0.0
        %589 = vmatpush1.xpose.msra.mxu0 0.0
        %590 = vmatprep.subr.mxu0 0.0
        %591 = vmatpush1.xpose.msra.mxu0 0.0
        %592 = vmatprep.subr.mxu0 0.0
        %593 = vmatpush1.xpose.msra.mxu0 0.0
        %594 = vmatprep.subr.mxu0 0.0
        %595 = vmatpush1.xpose.msra.mxu0 0.0
        %596 = vmatprep.subr.mxu0 0.0
        %597 = vmatpush1.xpose.msra.mxu0 0.0
        %598 = vmatprep.subr.mxu0 0.0
        %599 = vmatpush1.xpose.msra.mxu0 0.0
        %600 = vmatprep.subr.mxu0 0.0
        %601 = vmatpush1.xpose.msra.mxu0 0.0
        %602 = vmatprep.subr.mxu0 0.0
        %603 = vmatpush1.xpose.msra.mxu0 0.0
        %604 = vmatprep.subr.mxu0 0.0
        %605 = vmatpush1.xpose.msra.mxu0 0.0
        %606 = vmatprep.subr.mxu0 0.0
        %607 = vmatpush1.xpose.msra.mxu0 0.0
        %608 = vmatprep.subr.mxu0 0.0
        %609 = vmatpush1.xpose.msra.mxu0 0.0
        %610 = vmatprep.subr.mxu0 0.0
        %611 = vmatpush1.xpose.msra.mxu0 0.0
        %612 = vmatprep.subr.mxu0 0.0
        %613 = vmatpush1.xpose.msra.mxu0 0.0
        %614 = vmatprep.subr.mxu0 0.0
        %615 = vmatpush1.xpose.msra.mxu0 0.0
        %616 = vmatprep.subr.mxu0 0.0
        %617 = vmatpush1.xpose.msra.mxu0 0.0
        %618 = vmatprep.subr.mxu0 0.0
        %619 = vmatpush1.xpose.msra.mxu0 0.0
        %620 = vmatprep.subr.mxu0 0.0
        %621 = vmatpush1.xpose.msra.mxu0 0.0
        %622 = vmatprep.subr.mxu0 0.0
        %623 = vmatpush1.xpose.msra.mxu0 0.0
        %624 = vmatprep.mubr.f32.mxu0 0.0
        %625 = vmatmul.mubr.f32.gmra.mrb[0].mxu0 %v556
        %v626 = vpop.f32.mrb[0].mxu0
        %v627 = vadd.f32 0.0, %v626
        %v628 = vpop.f32.mrb[0].mxu0
        %629 = vdwg.mxu0
        %v630 = vsel %vm555, %v627, -inf
        %631 = vmax.xlane.f32.xlu0 %v630
        %v632 = vpop.xlane.xlu0 %631
        %v633 = vsub.f32 %v627, %v632
        %v634 = vmul.f32 %v633, 1.442695
        %v635 = vpow.pop %v634
        %v636 = vsel %vm555, %v635, 0.0
        %637 = vadd.xlane.f32.xlu0 %v636
        %v638 = vpop.xlane.xlu0 %637
        %v639 = vrcp.pop %v638
        %v640 = vmul.f32 %v635, %v639
        %641 = vrot.lane.b32.xlu0 %v549, 64
        %v642 = vpop.permute.xlu0 %641
        %v645 = vsel %vm555, %v640, 0
        %647 = vmatprep.subr.mxu0 0.0
        %648 = vmatpush1.msra.mxu0 %v642
        %649 = vmatprep.subr.mxu0 0.0
        %650 = vmatpush1.msra.mxu0 0.0
        %651 = vmatprep.subr.mxu0 0.0
        %652 = vmatpush1.msra.mxu0 0.0
        %653 = vmatprep.subr.mxu0 0.0
        %654 = vmatpush1.msra.mxu0 0.0
        %655 = vmatprep.subr.mxu0 0.0
        %656 = vmatpush1.msra.mxu0 0.0
        %657 = vmatprep.subr.mxu0 0.0
        %658 = vmatpush1.msra.mxu0 0.0
        %659 = vmatprep.subr.mxu0 0.0
        %660 = vmatpush1.msra.mxu0 0.0
        %661 = vmatprep.subr.mxu0 0.0
        %662 = vmatpush1.msra.mxu0 0.0
        %663 = vmatprep.subr.mxu0 0.0
        %664 = vmatpush1.msra.mxu0 0.0
        %665 = vmatprep.subr.mxu0 0.0
        %666 = vmatpush1.msra.mxu0 0.0
        %667 = vmatprep.subr.mxu0 0.0
        %668 = vmatpush1.msra.mxu0 0.0
        %669 = vmatprep.subr.mxu0 0.0
        %670 = vmatpush1.msra.mxu0 0.0
        %671 = vmatprep.subr.mxu0 0.0
        %672 = vmatpush1.msra.mxu0 0.0
        %673 = vmatprep.subr.mxu0 0.0
        %674 = vmatpush1.msra.mxu0 0.0
        %675 = vmatprep.subr.mxu0 0.0
        %676 = vmatpush1.msra.mxu0 0.0
        %677 = vmatprep.subr.mxu0 0.0
        %678 = vmatpush1.msra.mxu0 0.0
        %679 = vmatprep.subr.mxu0 0.0
        %680 = vmatpush1.msra.mxu0 0.0
        %681 = vmatprep.subr.mxu0 0.0
        %682 = vmatpush1.msra.mxu0 0.0
        %683 = vmatprep.subr.mxu0 0.0
        %684 = vmatpush1.msra.mxu0 0.0
        %685 = vmatprep.subr.mxu0 0.0
        %686 = vmatpush1.msra.mxu0 0.0
        %687 = vmatprep.subr.mxu0 0.0
        %688 = vmatpush1.msra.mxu0 0.0
        %689 = vmatprep.subr.mxu0 0.0
        %690 = vmatpush1.msra.mxu0 0.0
        %691 = vmatprep.subr.mxu0 0.0
        %692 = vmatpush1.msra.mxu0 0.0
        %693 = vmatprep.subr.mxu0 0.0
        %694 = vmatpush1.msra.mxu0 0.0
        %695 = vmatprep.subr.mxu0 0.0
        %696 = vmatpush1.msra.mxu0 0.0
        %697 = vmatprep.subr.mxu0 0.0
        %698 = vmatpush1.msra.mxu0 0.0
        %699 = vmatprep.subr.mxu0 0.0
        %700 = vmatpush1.msra.mxu0 0.0
        %701 = vmatprep.subr.mxu0 0.0
        %702 = vmatpush1.msra.mxu0 0.0
        %703 = vmatprep.subr.mxu0 0.0
        %704 = vmatpush1.msra.mxu0 0.0
        %705 = vmatprep.subr.mxu0 0.0
        %706 = vmatpush1.msra.mxu0 0.0
        %707 = vmatprep.subr.mxu0 0.0
        %708 = vmatpush1.msra.mxu0 0.0
        %709 = vmatprep.subr.mxu0 0.0
        %710 = vmatpush1.msra.mxu0 0.0
        %711 = vmatprep.mubr.f32.mxu0 0.0
        %712 = vmatmul.mubr.f32.gmra.mrb[0].mxu0 %v645
        %v713 = vpop.f32.mrb[0].mxu0
        %v714 = vadd.f32 0.0, %v713
        %v715 = vpop.f32.mrb[0].mxu0
        %716 = vdwg.mxu0
        %717 = vrot.lane.b32.xlu0 %v549, 120
        %v718 = vpop.permute.xlu0 %717
        %719 = vrot.lane.b32.xlu0 %v549, 88
        %v720 = vpop.permute.xlu0 %719
        %v721 = vsel %vm555, %v718, 0
        %v723 = vsel %vm555, %v720, 0
        %725 = vmatprep.subr.mxu0 0.0
        %726 = vmatpush1.xpose.msra.mxu0 %v723
        %727 = vmatprep.subr.mxu0 0.0
        %728 = vmatpush1.xpose.msra.mxu0 0.0
        %729 = vmatprep.subr.mxu0 0.0
        %730 = vmatpush1.xpose.msra.mxu0 0.0
        %731 = vmatprep.subr.mxu0 0.0
        %732 = vmatpush1.xpose.msra.mxu0 0.0
        %733 = vmatprep.subr.mxu0 0.0
        %734 = vmatpush1.xpose.msra.mxu0 0.0
        %735 = vmatprep.subr.mxu0 0.0
        %736 = vmatpush1.xpose.msra.mxu0 0.0
        %737 = vmatprep.subr.mxu0 0.0
        %738 = vmatpush1.xpose.msra.mxu0 0.0
        %739 = vmatprep.subr.mxu0 0.0
        %740 = vmatpush1.xpose.msra.mxu0 0.0
        %741 = vmatprep.subr.mxu0 0.0
        %742 = vmatpush1.xpose.msra.mxu0 0.0
        %743 = vmatprep.subr.mxu0 0.0
        %744 = vmatpush1.xpose.msra.mxu0 0.0
        %745 = vmatprep.subr.mxu0 0.0
        %746 = vmatpush1.xpose.msra.mxu0 0.0
        %747 = vmatprep.subr.mxu0 0.0
        %748 = vmatpush1.xpose.msra.mxu0 0.0
        %749 = vmatprep.subr.mxu0 0.0
        %750 = vmatpush1.xpose.msra.mxu0 0.0
        %751 = vmatprep.subr.mxu0 0.0
        %752 = vmatpush1.xpose.msra.mxu0 0.0
        %753 = vmatprep.subr.mxu0 0.0
        %754 = vmatpush1.xpose.msra.mxu0 0.0
        %755 = vmatprep.subr.mxu0 0.0
        %756 = vmatpush1.xpose.msra.mxu0 0.0
        %757 = vmatprep.subr.mxu0 0.0
        %758 = vmatpush1.xpose.msra.mxu0 0.0
        %759 = vmatprep.subr.mxu0 0.0
        %760 = vmatpush1.xpose.msra.mxu0 0.0
        %761 = vmatprep.subr.mxu0 0.0
        %762 = vmatpush1.xpose.msra.mxu0 0.0
        %763 = vmatprep.subr.mxu0 0.0
        %764 = vmatpush1.xpose.msra.mxu0 0.0
        %765 = vmatprep.subr.mxu0 0.0
        %766 = vmatpush1.xpose.msra.mxu0 0.0
        %767 = vmatprep.subr.mxu0 0.0
        %768 = vmatpush1.xpose.msra.mxu0 0.0
        %769 = vmatprep.subr.mxu0 0.0
        %770 = vmatpush1.xpose.msra.mxu0 0.0
        %771 = vmatprep.subr.mxu0 0.0
        %772 = vmatpush1.xpose.msra.mxu0 0.0
        %773 = vmatprep.subr.mxu0 0.0
        %774 = vmatpush1.xpose.msra.mxu0 0.0
        %775 = vmatprep.subr.mxu0 0.0
        %776 = vmatpush1.xpose.msra.mxu0 0.0
        %777 = vmatprep.subr.mxu0 0.0
        %778 = vmatpush1.xpose.msra.mxu0 0.0
        %779 = vmatprep.subr.mxu0 0.0
        %780 = vmatpush1.xpose.msra.mxu0 0.0
        %781 = vmatprep.subr.mxu0 0.0
        %782 = vmatpush1.xpose.msra.mxu0 0.0
        %783 = vmatprep.subr.mxu0 0.0
        %784 = vmatpush1.xpose.msra.mxu0 0.0
        %785 = vmatprep.subr.mxu0 0.0
        %786 = vmatpush1.xpose.msra.mxu0 0.0
        %787 = vmatprep.subr.mxu0 0.0
        %788 = vmatpush1.xpose.msra.mxu0 0.0
        %789 = vmatprep.mubr.f32.mxu0 0.0
        %790 = vmatmul.mubr.f32.gmra.mrb[0].mxu0 %v721
        %v791 = vpop.f32.mrb[0].mxu0
        %v792 = vadd.f32 0.0, %v791
        %v793 = vpop.f32.mrb[0].mxu0
        %794 = vdwg.mxu0
        %v795 = vsel %vm555, %v792, -inf
        %796 = vmax.xlane.f32.xlu0 %v795
        %v797 = vpop.xlane.xlu0 %796
        %v798 = vsub.f32 %v792, %v797
        %v799 = vmul.f32 %v798, 1.442695
        %v800 = vpow.pop %v799
        %v801 = vsel %vm555, %v800, 0.0
        %802 = vadd.xlane.f32.xlu0 %v801
        %v803 = vpop.xlane.xlu0 %802
        %v804 = vrcp.pop %v803
        %v805 = vmul.f32 %v800, %v804
        %806 = vrot.lane.b32.xlu0 %v549, 56
        %v807 = vpop.permute.xlu0 %806
        %v810 = vsel %vm555, %v805, 0
        %812 = vmatprep.subr.mxu0 0.0
        %813 = vmatpush1.msra.mxu0 %v807
        %814 = vmatprep.subr.mxu0 0.0
        %815 = vmatpush1.msra.mxu0 0.0
        %816 = vmatprep.subr.mxu0 0.0
        %817 = vmatpush1.msra.mxu0 0.0
        %818 = vmatprep.subr.mxu0 0.0
        %819 = vmatpush1.msra.mxu0 0.0
        %820 = vmatprep.subr.mxu0 0.0
        %821 = vmatpush1.msra.mxu0 0.0
        %822 = vmatprep.subr.mxu0 0.0
        %823 = vmatpush1.msra.mxu0 0.0
        %824 = vmatprep.subr.mxu0 0.0
        %825 = vmatpush1.msra.mxu0 0.0
        %826 = vmatprep.subr.mxu0 0.0
        %827 = vmatpush1.msra.mxu0 0.0
        %828 = vmatprep.subr.mxu0 0.0
        %829 = vmatpush1.msra.mxu0 0.0
        %830 = vmatprep.subr.mxu0 0.0
        %831 = vmatpush1.msra.mxu0 0.0
        %832 = vmatprep.subr.mxu0 0.0
        %833 = vmatpush1.msra.mxu0 0.0
        %834 = vmatprep.subr.mxu0 0.0
        %835 = vmatpush1.msra.mxu0 0.0
        %836 = vmatprep.subr.mxu0 0.0
        %837 = vmatpush1.msra.mxu0 0.0
        %838 = vmatprep.subr.mxu0 0.0
        %839 = vmatpush1.msra.mxu0 0.0
        %840 = vmatprep.subr.mxu0 0.0
        %841 = vmatpush1.msra.mxu0 0.0
        %842 = vmatprep.subr.mxu0 0.0
        %843 = vmatpush1.msra.mxu0 0.0
        %844 = vmatprep.subr.mxu0 0.0
        %845 = vmatpush1.msra.mxu0 0.0
        %846 = vmatprep.subr.mxu0 0.0
        %847 = vmatpush1.msra.mxu0 0.0
        %848 = vmatprep.subr.mxu0 0.0
        %849 = vmatpush1.msra.mxu0 0.0
        %850 = vmatprep.subr.mxu0 0.0
        %851 = vmatpush1.msra.mxu0 0.0
        %852 = vmatprep.subr.mxu0 0.0
        %853 = vmatpush1.msra.mxu0 0.0
        %854 = vmatprep.subr.mxu0 0.0
        %855 = vmatpush1.msra.mxu0 0.0
        %856 = vmatprep.subr.mxu0 0.0
        %857 = vmatpush1.msra.mxu0 0.0
        %858 = vmatprep.subr.mxu0 0.0
        %859 = vmatpush1.msra.mxu0 0.0
        %860 = vmatprep.subr.mxu0 0.0
        %861 = vmatpush1.msra.mxu0 0.0
        %862 = vmatprep.subr.mxu0 0.0
        %863 = vmatpush1.msra.mxu0 0.0
        %864 = vmatprep.subr.mxu0 0.0
        %865 = vmatpush1.msra.mxu0 0.0
        %866 = vmatprep.subr.mxu0 0.0
        %867 = vmatpush1.msra.mxu0 0.0
        %868 = vmatprep.subr.mxu0 0.0
        %869 = vmatpush1.msra.mxu0 0.0
        %870 = vmatprep.subr.mxu0 0.0
        %871 = vmatpush1.msra.mxu0 0.0
        %872 = vmatprep.subr.mxu0 0.0
        %873 = vmatpush1.msra.mxu0 0.0
        %874 = vmatprep.subr.mxu0 0.0
        %875 = vmatpush1.msra.mxu0 0.0
        %876 = vmatprep.mubr.f32.mxu0 0.0
        %877 = vmatmul.mubr.f32.gmra.mrb[0].mxu0 %v810
        %v878 = vpop.f32.mrb[0].mxu0
        %v879 = vadd.f32 0.0, %v878
        %v880 = vpop.f32.mrb[0].mxu0
        %881 = vdwg.mxu0
        %882 = vrot.lane.b32.xlu0 %v549, 112
        %v883 = vpop.permute.xlu0 %882
        %884 = vrot.lane.b32.xlu0 %v549, 80
        %v885 = vpop.permute.xlu0 %884
        %v886 = vsel %vm555, %v883, 0
        %v888 = vsel %vm555, %v885, 0
        %890 = vmatprep.subr.mxu0 0.0
        %891 = vmatpush1.xpose.msra.mxu0 %v888
        %892 = vmatprep.subr.mxu0 0.0
        %893 = vmatpush1.xpose.msra.mxu0 0.0
        %894 = vmatprep.subr.mxu0 0.0
        %895 = vmatpush1.xpose.msra.mxu0 0.0
        %896 = vmatprep.subr.mxu0 0.0
        %897 = vmatpush1.xpose.msra.mxu0 0.0
        %898 = vmatprep.subr.mxu0 0.0
        %899 = vmatpush1.xpose.msra.mxu0 0.0
        %900 = vmatprep.subr.mxu0 0.0
        %901 = vmatpush1.xpose.msra.mxu0 0.0
        %902 = vmatprep.subr.mxu0 0.0
        %903 = vmatpush1.xpose.msra.mxu0 0.0
        %904 = vmatprep.subr.mxu0 0.0
        %905 = vmatpush1.xpose.msra.mxu0 0.0
        %906 = vmatprep.subr.mxu0 0.0
        %907 = vmatpush1.xpose.msra.mxu0 0.0
        %908 = vmatprep.subr.mxu0 0.0
        %909 = vmatpush1.xpose.msra.mxu0 0.0
        %910 = vmatprep.subr.mxu0 0.0
        %911 = vmatpush1.xpose.msra.mxu0 0.0
        %912 = vmatprep.subr.mxu0 0.0
        %913 = vmatpush1.xpose.msra.mxu0 0.0
        %914 = vmatprep.subr.mxu0 0.0
        %915 = vmatpush1.xpose.msra.mxu0 0.0
        %916 = vmatprep.subr.mxu0 0.0
        %917 = vmatpush1.xpose.msra.mxu0 0.0
        %918 = vmatprep.subr.mxu0 0.0
        %919 = vmatpush1.xpose.msra.mxu0 0.0
        %920 = vmatprep.subr.mxu0 0.0
        %921 = vmatpush1.xpose.msra.mxu0 0.0
        %922 = vmatprep.subr.mxu0 0.0
        %923 = vmatpush1.xpose.msra.mxu0 0.0
        %924 = vmatprep.subr.mxu0 0.0
        %925 = vmatpush1.xpose.msra.mxu0 0.0
        %926 = vmatprep.subr.mxu0 0.0
        %927 = vmatpush1.xpose.msra.mxu0 0.0
        %928 = vmatprep.subr.mxu0 0.0
        %929 = vmatpush1.xpose.msra.mxu0 0.0
        %930 = vmatprep.subr.mxu0 0.0
        %931 = vmatpush1.xpose.msra.mxu0 0.0
        %932 = vmatprep.subr.mxu0 0.0
        %933 = vmatpush1.xpose.msra.mxu0 0.0
        %934 = vmatprep.subr.mxu0 0.0
        %935 = vmatpush1.xpose.msra.mxu0 0.0
        %936 = vmatprep.subr.mxu0 0.0
        %937 = vmatpush1.xpose.msra.mxu0 0.0
        %938 = vmatprep.subr.mxu0 0.0
        %939 = vmatpush1.xpose.msra.mxu0 0.0
        %940 = vmatprep.subr.mxu0 0.0
        %941 = vmatpush1.xpose.msra.mxu0 0.0
        %942 = vmatprep.subr.mxu0 0.0
        %943 = vmatpush1.xpose.msra.mxu0 0.0
        %944 = vmatprep.subr.mxu0 0.0
        %945 = vmatpush1.xpose.msra.mxu0 0.0
        %946 = vmatprep.subr.mxu0 0.0
        %947 = vmatpush1.xpose.msra.mxu0 0.0
        %948 = vmatprep.subr.mxu0 0.0
        %949 = vmatpush1.xpose.msra.mxu0 0.0
        %950 = vmatprep.subr.mxu0 0.0
        %951 = vmatpush1.xpose.msra.mxu0 0.0
        %952 = vmatprep.subr.mxu0 0.0
        %953 = vmatpush1.xpose.msra.mxu0 0.0
        %954 = vmatprep.mubr.f32.mxu0 0.0
        %955 = vmatmul.mubr.f32.gmra.mrb[0].mxu0 %v886
        %v956 = vpop.f32.mrb[0].mxu0
        %v957 = vadd.f32 0.0, %v956
        %v958 = vpop.f32.mrb[0].mxu0
        %959 = vdwg.mxu0
        %v960 = vsel %vm555, %v957, -inf
        %961 = vmax.xlane.f32.xlu0 %v960
        %v962 = vpop.xlane.xlu0 %961
        %v963 = vsub.f32 %v957, %v962
        %v964 = vmul.f32 %v963, 1.442695
        %v965 = vpow.pop %v964
        %v966 = vsel %vm555, %v965, 0.0
        %967 = vadd.xlane.f32.xlu0 %v966
        %v968 = vpop.xlane.xlu0 %967
        %v969 = vrcp.pop %v968
        %v970 = vmul.f32 %v965, %v969
        %971 = vrot.lane.b32.xlu0 %v549, 48
        %v972 = vpop.permute.xlu0 %971
        %v975 = vsel %vm555, %v970, 0
        %977 = vmatprep.subr.mxu0 0.0
        %978 = vmatpush1.msra.mxu0 %v972
        %979 = vmatprep.subr.mxu0 0.0
        %980 = vmatpush1.msra.mxu0 0.0
        %981 = vmatprep.subr.mxu0 0.0
        %982 = vmatpush1.msra.mxu0 0.0
        %983 = vmatprep.subr.mxu0 0.0
        %984 = vmatpush1.msra.mxu0 0.0
        %985 = vmatprep.subr.mxu0 0.0
        %986 = vmatpush1.msra.mxu0 0.0
        %987 = vmatprep.subr.mxu0 0.0
        %988 = vmatpush1.msra.mxu0 0.0
        %989 = vmatprep.subr.mxu0 0.0
        %990 = vmatpush1.msra.mxu0 0.0
        %991 = vmatprep.subr.mxu0 0.0
        %992 = vmatpush1.msra.mxu0 0.0
        %993 = vmatprep.subr.mxu0 0.0
        %994 = vmatpush1.msra.mxu0 0.0
        %995 = vmatprep.subr.mxu0 0.0
        %996 = vmatpush1.msra.mxu0 0.0
        %997 = vmatprep.subr.mxu0 0.0
        %998 = vmatpush1.msra.mxu0 0.0
        %999 = vmatprep.subr.mxu0 0.0
        %1000 = vmatpush1.msra.mxu0 0.0
        %1001 = vmatprep.subr.mxu0 0.0
        %1002 = vmatpush1.msra.mxu0 0.0
        %1003 = vmatprep.subr.mxu0 0.0
        %1004 = vmatpush1.msra.mxu0 0.0
        %1005 = vmatprep.subr.mxu0 0.0
        %1006 = vmatpush1.msra.mxu0 0.0
        %1007 = vmatprep.subr.mxu0 0.0
        %1008 = vmatpush1.msra.mxu0 0.0
        %1009 = vmatprep.subr.mxu0 0.0
        %1010 = vmatpush1.msra.mxu0 0.0
        %1011 = vmatprep.subr.mxu0 0.0
        %1012 = vmatpush1.msra.mxu0 0.0
        %1013 = vmatprep.subr.mxu0 0.0
        %1014 = vmatpush1.msra.mxu0 0.0
        %1015 = vmatprep.subr.mxu0 0.0
        %1016 = vmatpush1.msra.mxu0 0.0
        %1017 = vmatprep.subr.mxu0 0.0
        %1018 = vmatpush1.msra.mxu0 0.0
        %1019 = vmatprep.subr.mxu0 0.0
        %1020 = vmatpush1.msra.mxu0 0.0
        %1021 = vmatprep.subr.mxu0 0.0
        %1022 = vmatpush1.msra.mxu0 0.0
        %1023 = vmatprep.subr.mxu0 0.0
        %1024 = vmatpush1.msra.mxu0 0.0
        %1025 = vmatprep.subr.mxu0 0.0
        %1026 = vmatpush1.msra.mxu0 0.0
        %1027 = vmatprep.subr.mxu0 0.0
        %1028 = vmatpush1.msra.mxu0 0.0
        %1029 = vmatprep.subr.mxu0 0.0
        %1030 = vmatpush1.msra.mxu0 0.0
        %1031 = vmatprep.subr.mxu0 0.0
        %1032 = vmatpush1.msra.mxu0 0.0
        %1033 = vmatprep.subr.mxu0 0.0
        %1034 = vmatpush1.msra.mxu0 0.0
        %1035 = vmatprep.subr.mxu0 0.0
        %1036 = vmatpush1.msra.mxu0 0.0
        %1037 = vmatprep.subr.mxu0 0.0
        %1038 = vmatpush1.msra.mxu0 0.0
        %1039 = vmatprep.subr.mxu0 0.0
        %1040 = vmatpush1.msra.mxu0 0.0
        %1041 = vmatprep.mubr.f32.mxu0 0.0
        %1042 = vmatmul.mubr.f32.gmra.mrb[0].mxu0 %v975
        %v1043 = vpop.f32.mrb[0].mxu0
        %v1044 = vadd.f32 0.0, %v1043
        %v1045 = vpop.f32.mrb[0].mxu0
        %1046 = vdwg.mxu0
        %1047 = vrot.lane.b32.xlu0 %v549, 104
        %v1048 = vpop.permute.xlu0 %1047
        %1049 = vrot.lane.b32.xlu0 %v549, 72
        %v1050 = vpop.permute.xlu0 %1049
        %v1051 = vsel %vm555, %v1048, 0
        %v1053 = vsel %vm555, %v1050, 0
        %1055 = vmatprep.subr.mxu0 0.0
        %1056 = vmatpush1.xpose.msra.mxu0 %v1053
        %1057 = vmatprep.subr.mxu0 0.0
        %1058 = vmatpush1.xpose.msra.mxu0 0.0
        %1059 = vmatprep.subr.mxu0 0.0
        %1060 = vmatpush1.xpose.msra.mxu0 0.0
        %1061 = vmatprep.subr.mxu0 0.0
        %1062 = vmatpush1.xpose.msra.mxu0 0.0
        %1063 = vmatprep.subr.mxu0 0.0
        %1064 = vmatpush1.xpose.msra.mxu0 0.0
        %1065 = vmatprep.subr.mxu0 0.0
        %1066 = vmatpush1.xpose.msra.mxu0 0.0
        %1067 = vmatprep.subr.mxu0 0.0
        %1068 = vmatpush1.xpose.msra.mxu0 0.0
        %1069 = vmatprep.subr.mxu0 0.0
        %1070 = vmatpush1.xpose.msra.mxu0 0.0
        %1071 = vmatprep.subr.mxu0 0.0
        %1072 = vmatpush1.xpose.msra.mxu0 0.0
        %1073 = vmatprep.subr.mxu0 0.0
        %1074 = vmatpush1.xpose.msra.mxu0 0.0
        %1075 = vmatprep.subr.mxu0 0.0
        %1076 = vmatpush1.xpose.msra.mxu0 0.0
        %1077 = vmatprep.subr.mxu0 0.0
        %1078 = vmatpush1.xpose.msra.mxu0 0.0
        %1079 = vmatprep.subr.mxu0 0.0
        %1080 = vmatpush1.xpose.msra.mxu0 0.0
        %1081 = vmatprep.subr.mxu0 0.0
        %1082 = vmatpush1.xpose.msra.mxu0 0.0
        %1083 = vmatprep.subr.mxu0 0.0
        %1084 = vmatpush1.xpose.msra.mxu0 0.0
        %1085 = vmatprep.subr.mxu0 0.0
        %1086 = vmatpush1.xpose.msra.mxu0 0.0
        %1087 = vmatprep.subr.mxu0 0.0
        %1088 = vmatpush1.xpose.msra.mxu0 0.0
        %1089 = vmatprep.subr.mxu0 0.0
        %1090 = vmatpush1.xpose.msra.mxu0 0.0
        %1091 = vmatprep.subr.mxu0 0.0
        %1092 = vmatpush1.xpose.msra.mxu0 0.0
        %1093 = vmatprep.subr.mxu0 0.0
        %1094 = vmatpush1.xpose.msra.mxu0 0.0
        %1095 = vmatprep.subr.mxu0 0.0
        %1096 = vmatpush1.xpose.msra.mxu0 0.0
        %1097 = vmatprep.subr.mxu0 0.0
        %1098 = vmatpush1.xpose.msra.mxu0 0.0
        %1099 = vmatprep.subr.mxu0 0.0
        %1100 = vmatpush1.xpose.msra.mxu0 0.0
        %1101 = vmatprep.subr.mxu0 0.0
        %1102 = vmatpush1.xpose.msra.mxu0 0.0
        %1103 = vmatprep.subr.mxu0 0.0
        %1104 = vmatpush1.xpose.msra.mxu0 0.0
        %1105 = vmatprep.subr.mxu0 0.0
        %1106 = vmatpush1.xpose.msra.mxu0 0.0
        %1107 = vmatprep.subr.mxu0 0.0
        %1108 = vmatpush1.xpose.msra.mxu0 0.0
        %1109 = vmatprep.subr.mxu0 0.0
        %1110 = vmatpush1.xpose.msra.mxu0 0.0
        %1111 = vmatprep.subr.mxu0 0.0
        %1112 = vmatpush1.xpose.msra.mxu0 0.0
        %1113 = vmatprep.subr.mxu0 0.0
        %1114 = vmatpush1.xpose.msra.mxu0 0.0
        %1115 = vmatprep.subr.mxu0 0.0
        %1116 = vmatpush1.xpose.msra.mxu0 0.0
        %1117 = vmatprep.subr.mxu0 0.0
        %1118 = vmatpush1.xpose.msra.mxu0 0.0
        %1119 = vmatprep.mubr.f32.mxu0 0.0
        %1120 = vmatmul.mubr.f32.gmra.mrb[0].mxu0 %v1051
        %v1121 = vpop.f32.mrb[0].mxu0
        %v1122 = vadd.f32 0.0, %v1121
        %v1123 = vpop.f32.mrb[0].mxu0
        %1124 = vdwg.mxu0
        %v1125 = vsel %vm555, %v1122, -inf
        %1126 = vmax.xlane.f32.xlu0 %v1125
        %v1127 = vpop.xlane.xlu0 %1126
        %v1128 = vsub.f32 %v1122, %v1127
        %v1129 = vmul.f32 %v1128, 1.442695
        %v1130 = vpow.pop %v1129
        %v1131 = vsel %vm555, %v1130, 0.0
        %1132 = vadd.xlane.f32.xlu0 %v1131
        %v1133 = vpop.xlane.xlu0 %1132
        %v1134 = vrcp.pop %v1133
        %v1135 = vmul.f32 %v1130, %v1134
        %1136 = vrot.lane.b32.xlu0 %v549, 40
        %v1137 = vpop.permute.xlu0 %1136
        %v1140 = vsel %vm555, %v1135, 0
        %1142 = vmatprep.subr.mxu0 0.0
        %1143 = vmatpush1.msra.mxu0 %v1137
        %1144 = vmatprep.subr.mxu0 0.0
        %1145 = vmatpush1.msra.mxu0 0.0
        %1146 = vmatprep.subr.mxu0 0.0
        %1147 = vmatpush1.msra.mxu0 0.0
        %1148 = vmatprep.subr.mxu0 0.0
        %1149 = vmatpush1.msra.mxu0 0.0
        %1150 = vmatprep.subr.mxu0 0.0
        %1151 = vmatpush1.msra.mxu0 0.0
        %1152 = vmatprep.subr.mxu0 0.0
        %1153 = vmatpush1.msra.mxu0 0.0
        %1154 = vmatprep.subr.mxu0 0.0
        %1155 = vmatpush1.msra.mxu0 0.0
        %1156 = vmatprep.subr.mxu0 0.0
        %1157 = vmatpush1.msra.mxu0 0.0
        %1158 = vmatprep.subr.mxu0 0.0
        %1159 = vmatpush1.msra.mxu0 0.0
        %1160 = vmatprep.subr.mxu0 0.0
        %1161 = vmatpush1.msra.mxu0 0.0
        %1162 = vmatprep.subr.mxu0 0.0
        %1163 = vmatpush1.msra.mxu0 0.0
        %1164 = vmatprep.subr.mxu0 0.0
        %1165 = vmatpush1.msra.mxu0 0.0
        %1166 = vmatprep.subr.mxu0 0.0
        %1167 = vmatpush1.msra.mxu0 0.0
        %1168 = vmatprep.subr.mxu0 0.0
        %1169 = vmatpush1.msra.mxu0 0.0
        %1170 = vmatprep.subr.mxu0 0.0
        %1171 = vmatpush1.msra.mxu0 0.0
        %1172 = vmatprep.subr.mxu0 0.0
        %1173 = vmatpush1.msra.mxu0 0.0
        %1174 = vmatprep.subr.mxu0 0.0
        %1175 = vmatpush1.msra.mxu0 0.0
        %1176 = vmatprep.subr.mxu0 0.0
        %1177 = vmatpush1.msra.mxu0 0.0
        %1178 = vmatprep.subr.mxu0 0.0
        %1179 = vmatpush1.msra.mxu0 0.0
        %1180 = vmatprep.subr.mxu0 0.0
        %1181 = vmatpush1.msra.mxu0 0.0
        %1182 = vmatprep.subr.mxu0 0.0
        %1183 = vmatpush1.msra.mxu0 0.0
        %1184 = vmatprep.subr.mxu0 0.0
        %1185 = vmatpush1.msra.mxu0 0.0
        %1186 = vmatprep.subr.mxu0 0.0
        %1187 = vmatpush1.msra.mxu0 0.0
        %1188 = vmatprep.subr.mxu0 0.0
        %1189 = vmatpush1.msra.mxu0 0.0
        %1190 = vmatprep.subr.mxu0 0.0
        %1191 = vmatpush1.msra.mxu0 0.0
        %1192 = vmatprep.subr.mxu0 0.0
        %1193 = vmatpush1.msra.mxu0 0.0
        %1194 = vmatprep.subr.mxu0 0.0
        %1195 = vmatpush1.msra.mxu0 0.0
        %1196 = vmatprep.subr.mxu0 0.0
        %1197 = vmatpush1.msra.mxu0 0.0
        %1198 = vmatprep.subr.mxu0 0.0
        %1199 = vmatpush1.msra.mxu0 0.0
        %1200 = vmatprep.subr.mxu0 0.0
        %1201 = vmatpush1.msra.mxu0 0.0
        %1202 = vmatprep.subr.mxu0 0.0
        %1203 = vmatpush1.msra.mxu0 0.0
        %1204 = vmatprep.subr.mxu0 0.0
        %1205 = vmatpush1.msra.mxu0 0.0
        %1206 = vmatprep.mubr.f32.mxu0 0.0
        %1207 = vmatmul.mubr.f32.gmra.mrb[0].mxu0 %v1140
        %v1208 = vpop.f32.mrb[0].mxu0
        %v1209 = vadd.f32 0.0, %v1208
        %v1210 = vpop.f32.mrb[0].mxu0
        %1211 = vdwg.mxu0
        %1213 = vrot.lane.b32.xlu0 %v879, 8
        %v1214 = vpop.permute.xlu0 %1213
        %1217 = vrot.lane.b32.xlu0 %v1044, 16
        %v1218 = vpop.permute.xlu0 %1217
        %1221 = vrot.lane.b32.xlu0 %v1209, 24
        %v1222 = vpop.permute.xlu0 %1221
        %v1224 = vsel %vm555, %v714, %v1214
        %vm1225 = vcmask 130048
        %v1226 = vsel %vm1225, %v1224, %v1218
        %vm1227 = vcmask 195584
        %v1228 = vsel %vm1227, %v1226, %v1222
        %1229 = vst.msk [vmem:[#allocation2] sm:$0xff] %vm439, %v1228
        %v1230 = vld [vmem:[#allocation2] sm:$0xff]
        %v1231 = vld [vmem:[%s5] sm:$0xff]
        %v1232 = vld [vmem:[%s5 + $0x8] sm:$0xff]
        %v1233 = vld [vmem:[%s5 + $0x10] sm:$0xff]
        %v1234 = vld [vmem:[%s5 + $0x18] sm:$0xff]
        %v1235 = vld [vmem:[%s6] sm:$0x1]
        %v1237 = vlaneseq
        %v1238 = vshrl.u32 %v1237, 7
        %v1239 = vsub.s32 0, %v1238
        %v1240 = vrot.slane %v1235, %v1239
        %v1243 = vsel %vm439, %v1230, 0
        %1245 = vmatprep.subr.mxu0 0.0
        %1246 = vmatpush1.msra.mxu0 %v1231
        %1247 = vmatprep.subr.mxu0 0.0
        %1248 = vmatpush1.msra.mxu0 %v1232
        %1249 = vmatprep.subr.mxu0 0.0
        %1250 = vmatpush1.msra.mxu0 %v1233
        %1251 = vmatprep.subr.mxu0 0.0
        %1252 = vmatpush1.msra.mxu0 %v1234
        %1253 = vmatprep.subr.mxu0 0.0
        %1254 = vmatpush1.msra.mxu0 0.0
        %1255 = vmatprep.subr.mxu0 0.0
        %1256 = vmatpush1.msra.mxu0 0.0
        %1257 = vmatprep.subr.mxu0 0.0
        %1258 = vmatpush1.msra.mxu0 0.0
        %1259 = vmatprep.subr.mxu0 0.0
        %1260 = vmatpush1.msra.mxu0 0.0
        %1261 = vmatprep.subr.mxu0 0.0
        %1262 = vmatpush1.msra.mxu0 0.0
        %1263 = vmatprep.subr.mxu0 0.0
        %1264 = vmatpush1.msra.mxu0 0.0
        %1265 = vmatprep.subr.mxu0 0.0
        %1266 = vmatpush1.msra.mxu0 0.0
        %1267 = vmatprep.subr.mxu0 0.0
        %1268 = vmatpush1.msra.mxu0 0.0
        %1269 = vmatprep.subr.mxu0 0.0
        %1270 = vmatpush1.msra.mxu0 0.0
        %1271 = vmatprep.subr.mxu0 0.0
        %1272 = vmatpush1.msra.mxu0 0.0
        %1273 = vmatprep.subr.mxu0 0.0
        %1274 = vmatpush1.msra.mxu0 0.0
        %1275 = vmatprep.subr.mxu0 0.0
        %1276 = vmatpush1.msra.mxu0 0.0
        %1277 = vmatprep.subr.mxu0 0.0
        %1278 = vmatpush1.msra.mxu0 0.0
        %1279 = vmatprep.subr.mxu0 0.0
        %1280 = vmatpush1.msra.mxu0 0.0
        %1281 = vmatprep.subr.mxu0 0.0
        %1282 = vmatpush1.msra.mxu0 0.0
        %1283 = vmatprep.subr.mxu0 0.0
        %1284 = vmatpush1.msra.mxu0 0.0
        %1285 = vmatprep.subr.mxu0 0.0
        %1286 = vmatpush1.msra.mxu0 0.0
        %1287 = vmatprep.subr.mxu0 0.0
        %1288 = vmatpush1.msra.mxu0 0.0
        %1289 = vmatprep.subr.mxu0 0.0
        %1290 = vmatpush1.msra.mxu0 0.0
        %1291 = vmatprep.subr.mxu0 0.0
        %1292 = vmatpush1.msra.mxu0 0.0
        %1293 = vmatprep.subr.mxu0 0.0
        %1294 = vmatpush1.msra.mxu0 0.0
        %1295 = vmatprep.subr.mxu0 0.0
        %1296 = vmatpush1.msra.mxu0 0.0
        %1297 = vmatprep.subr.mxu0 0.0
        %1298 = vmatpush1.msra.mxu0 0.0
        %1299 = vmatprep.subr.mxu0 0.0
        %1300 = vmatpush1.msra.mxu0 0.0
        %1301 = vmatprep.subr.mxu0 0.0
        %1302 = vmatpush1.msra.mxu0 0.0
        %1303 = vmatprep.subr.mxu0 0.0
        %1304 = vmatpush1.msra.mxu0 0.0
        %1305 = vmatprep.subr.mxu0 0.0
        %1306 = vmatpush1.msra.mxu0 0.0
        %1307 = vmatprep.subr.mxu0 0.0
        %1308 = vmatpush1.msra.mxu0 0.0
        %1309 = vmatprep.mubr.f32.mxu0 0.0
        %1310 = vmatmul.mubr.f32.gmra.mrb[0].mxu0 %v1243
        %v1311 = vpop.f32.mrb[0].mxu0
        %v1312 = vadd.f32 %v1240, %v1311
        %v1313 = vpop.f32.mrb[0].mxu0
        %1314 = vdwg.mxu0
        %v1315 = vadd.f32 %v436, %v1312
        %v1316 = vld [vmem:[%s7] sm:$0x1]
        %v1317 = vld [vmem:[%s8] sm:$0x1]
        %v1318 = vsel %vm439, %v1315, 0.0
        %1319 = vadd.xlane.f32.xlu0 %v1318
        %v1320 = vpop.xlane.xlu0 %1319
        %v1321 = vmul.f32 %v1320, %v443
        %v1322 = vsub.f32 %v1315, %v1321
        %v1323 = vmul.f32 %v1322, %v1322
        %v1324 = vsel %vm439, %v1323, 0.0
        %1325 = vadd.xlane.f32.xlu0 %v1324
        %v1326 = vpop.xlane.xlu0 %1325
        %v1327 = vmul.f32 %v1326, %v443
        %v1328 = vadd.f32 %v1327, 1e-05
        %v1329 = vrsqrt.pop %v1328
        %v1330 = vmul.f32 %v1322, %v1329
        %v1332 = vlaneseq
        %v1333 = vshrl.u32 %v1332, 7
        %v1334 = vsub.s32 0, %v1333
        %v1335 = vrot.slane %v1316, %v1334
        %v1337 = vmul.f32 %v1330, %v1335
        %v1339 = vlaneseq
        %v1340 = vshrl.u32 %v1339, 7
        %v1341 = vsub.s32 0, %v1340
        %v1342 = vrot.slane %v1317, %v1341
        %v1344 = vadd.f32 %v1337, %v1342
        %v1345 = vld [vmem:[%s12] sm:$0x1]
        %v1347 = vlaneseq
        %v1348 = vshrl.u32 %v1347, 7
        %v1349 = vsub.s32 0, %v1348
        %v1350 = vrot.slane %v1345, %v1349
        %v1352 = vadd.f32 %v1315, %v1350
        %v1353 = vld [vmem:[%s9] sm:$0xff]
        %v1354 = vld [vmem:[%s9 + $0x8] sm:$0xff]
        %v1355 = vld [vmem:[%s9 + $0x10] sm:$0xff]
        %v1356 = vld [vmem:[%s9 + $0x18] sm:$0xff]
        %v1357 = vld [vmem:[%s10] sm:$0x1]
        %v1359 = vlaneseq
        %v1360 = vshrl.u32 %v1359, 7
        %v1361 = vsub.s32 0, %v1360
        %v1362 = vrot.slane %v1357, %v1361
        %v1365 = vsel %vm439, %v1344, 0
        %1367 = vmatprep.subr.mxu0 0.0
        %1368 = vmatpush1.msra.mxu0 %v1353
        %1369 = vmatprep.subr.mxu0 0.0
        %1370 = vmatpush1.msra.mxu0 %v1354
        %1371 = vmatprep.subr.mxu0 0.0
        %1372 = vmatpush1.msra.mxu0 %v1355
        %1373 = vmatprep.subr.mxu0 0.0
        %1374 = vmatpush1.msra.mxu0 %v1356
        %1375 = vmatprep.subr.mxu0 0.0
        %1376 = vmatpush1.msra.mxu0 0.0
        %1377 = vmatprep.subr.mxu0 0.0
        %1378 = vmatpush1.msra.mxu0 0.0
        %1379 = vmatprep.subr.mxu0 0.0
        %1380 = vmatpush1.msra.mxu0 0.0
        %1381 = vmatprep.subr.mxu0 0.0
        %1382 = vmatpush1.msra.mxu0 0.0
        %1383 = vmatprep.subr.mxu0 0.0
        %1384 = vmatpush1.msra.mxu0 0.0
        %1385 = vmatprep.subr.mxu0 0.0
        %1386 = vmatpush1.msra.mxu0 0.0
        %1387 = vmatprep.subr.mxu0 0.0
        %1388 = vmatpush1.msra.mxu0 0.0
        %1389 = vmatprep.subr.mxu0 0.0
        %1390 = vmatpush1.msra.mxu0 0.0
        %1391 = vmatprep.subr.mxu0 0.0
        %1392 = vmatpush1.msra.mxu0 0.0
        %1393 = vmatprep.subr.mxu0 0.0
        %1394 = vmatpush1.msra.mxu0 0.0
        %1395 = vmatprep.subr.mxu0 0.0
        %1396 = vmatpush1.msra.mxu0 0.0
        %1397 = vmatprep.subr.mxu0 0.0
        %1398 = vmatpush1.msra.mxu0 0.0
        %1399 = vmatprep.subr.mxu0 0.0
        %1400 = vmatpush1.msra.mxu0 0.0
        %1401 = vmatprep.subr.mxu0 0.0
        %1402 = vmatpush1.msra.mxu0 0.0
        %1403 = vmatprep.subr.mxu0 0.0
        %1404 = vmatpush1.msra.mxu0 0.0
        %1405 = vmatprep.subr.mxu0 0.0
        %1406 = vmatpush1.msra.mxu0 0.0
        %1407 = vmatprep.subr.mxu0 0.0
        %1408 = vmatpush1.msra.mxu0 0.0
        %1409 = vmatprep.subr.mxu0 0.0
        %1410 = vmatpush1.msra.mxu0 0.0
        %1411 = vmatprep.subr.mxu0 0.0
        %1412 = vmatpush1.msra.mxu0 0.0
        %1413 = vmatprep.subr.mxu0 0.0
        %1414 = vmatpush1.msra.mxu0 0.0
        %1415 = vmatprep.subr.mxu0 0.0
        %1416 = vmatpush1.msra.mxu0 0.0
        %1417 = vmatprep.subr.mxu0 0.0
        %1418 = vmatpush1.msra.mxu0 0.0
        %1419 = vmatprep.subr.mxu0 0.0
        %1420 = vmatpush1.msra.mxu0 0.0
        %1421 = vmatprep.subr.mxu0 0.0
        %1422 = vmatpush1.msra.mxu0 0.0
        %1423 = vmatprep.subr.mxu0 0.0
        %1424 = vmatpush1.msra.mxu0 0.0
        %1425 = vmatprep.subr.mxu0 0.0
        %1426 = vmatpush1.msra.mxu0 0.0
        %1427 = vmatprep.subr.mxu0 0.0
        %1428 = vmatpush1.msra.mxu0 0.0
        %1429 = vmatprep.subr.mxu0 0.0
        %1430 = vmatpush1.msra.mxu0 0.0
        %1431 = vmatprep.mubr.f32.mxu0 0.0
        %1432 = vmatmul.mubr.f32.gmra.mrb[0].mxu0 %v1365
        %v1433 = vpop.f32.mrb[0].mxu0
        %v1434 = vadd.f32 %v1362, %v1433
        %v1435 = vpop.f32.mrb[0].mxu0
        %1436 = vdwg.mxu0
        %v1437 = vmul.f32 %v1434, 1.702
        %v1438 = vxor.u32 %v1437, 2147483648
        %v1439 = vmul.f32 %v1438, 1.442695
        %v1440 = vpow.pop %v1439
        %v1441 = vadd.f32 %v1440, 1.0
        %v1442 = vrcp.pop %v1441
        %v1443 = vmul.f32 1.0, %v1442
        %v1444 = vmul.f32 %v1434, %v1443
        %v1445 = vld [vmem:[%s11] sm:$0xff]
        %v1446 = vld [vmem:[%s11 + $0x8] sm:$0xff]
        %v1447 = vld [vmem:[%s11 + $0x10] sm:$0xff]
        %v1448 = vld [vmem:[%s11 + $0x18] sm:$0xff]
        %v1449 = vld [vmem:[%s11 + $0x20] sm:$0xff]
        %v1450 = vld [vmem:[%s11 + $0x28] sm:$0xff]
        %v1451 = vld [vmem:[%s11 + $0x30] sm:$0xff]
        %v1452 = vld [vmem:[%s11 + $0x38] sm:$0xff]
        %v1453 = vld [vmem:[%s11 + $0x40] sm:$0xff]
        %v1454 = vld [vmem:[%s11 + $0x48] sm:$0xff]
        %v1455 = vld [vmem:[%s11 + $0x50] sm:$0xff]
        %v1456 = vld [vmem:[%s11 + $0x58] sm:$0xff]
        %v1457 = vld [vmem:[%s11 + $0x60] sm:$0xff]
        %v1458 = vld [vmem:[%s11 + $0x68] sm:$0xff]
        %v1459 = vld [vmem:[%s11 + $0x70] sm:$0xff]
        %v1460 = vld [vmem:[%s11 + $0x78] sm:$0xff]
        %1461 = vmatprep.subr.mxu0 0.0
        %1462 = vmatpush1.msra.mxu0 %v1445
        %1463 = vmatprep.subr.mxu0 0.0
        %1464 = vmatpush1.msra.mxu0 %v1446
        %1465 = vmatprep.subr.mxu0 0.0
        %1466 = vmatpush1.msra.mxu0 %v1447
        %1467 = vmatprep.subr.mxu0 0.0
        %1468 = vmatpush1.msra.mxu0 %v1448
        %1469 = vmatprep.subr.mxu0 0.0
        %1470 = vmatpush1.msra.mxu0 %v1449
        %1471 = vmatprep.subr.mxu0 0.0
        %1472 = vmatpush1.msra.mxu0 %v1450
        %1473 = vmatprep.subr.mxu0 0.0
        %1474 = vmatpush1.msra.mxu0 %v1451
        %1475 = vmatprep.subr.mxu0 0.0
        %1476 = vmatpush1.msra.mxu0 %v1452
        %1477 = vmatprep.subr.mxu0 0.0
        %1478 = vmatpush1.msra.mxu0 %v1453
        %1479 = vmatprep.subr.mxu0 0.0
        %1480 = vmatpush1.msra.mxu0 %v1454
        %1481 = vmatprep.subr.mxu0 0.0
        %1482 = vmatpush1.msra.mxu0 %v1455
        %1483 = vmatprep.subr.mxu0 0.0
        %1484 = vmatpush1.msra.mxu0 %v1456
        %1485 = vmatprep.subr.mxu0 0.0
        %1486 = vmatpush1.msra.mxu0 %v1457
        %1487 = vmatprep.subr.mxu0 0.0
        %1488 = vmatpush1.msra.mxu0 %v1458
        %1489 = vmatprep.subr.mxu0 0.0
        %1490 = vmatpush1.msra.mxu0 %v1459
        %1491 = vmatprep.subr.mxu0 0.0
        %1492 = vmatpush1.msra.mxu0 %v1460
        %1493 = vmatprep.subr.mxu0 0.0
        %1494 = vmatpush1.msra.mxu0 0.0
        %1495 = vmatprep.subr.mxu0 0.0
        %1496 = vmatpush1.msra.mxu0 0.0
        %1497 = vmatprep.subr.mxu0 0.0
        %1498 = vmatpush1.msra.mxu0 0.0
        %1499 = vmatprep.subr.mxu0 0.0
        %1500 = vmatpush1.msra.mxu0 0.0
        %1501 = vmatprep.subr.mxu0 0.0
        %1502 = vmatpush1.msra.mxu0 0.0
        %1503 = vmatprep.subr.mxu0 0.0
        %1504 = vmatpush1.msra.mxu0 0.0
        %1505 = vmatprep.subr.mxu0 0.0
        %1506 = vmatpush1.msra.mxu0 0.0
        %1507 = vmatprep.subr.mxu0 0.0
        %1508 = vmatpush1.msra.mxu0 0.0
        %1509 = vmatprep.subr.mxu0 0.0
        %1510 = vmatpush1.msra.mxu0 0.0
        %1511 = vmatprep.subr.mxu0 0.0
        %1512 = vmatpush1.msra.mxu0 0.0
        %1513 = vmatprep.subr.mxu0 0.0
        %1514 = vmatpush1.msra.mxu0 0.0
        %1515 = vmatprep.subr.mxu0 0.0
        %1516 = vmatpush1.msra.mxu0 0.0
        %1517 = vmatprep.subr.mxu0 0.0
        %1518 = vmatpush1.msra.mxu0 0.0
        %1519 = vmatprep.subr.mxu0 0.0
        %1520 = vmatpush1.msra.mxu0 0.0
        %1521 = vmatprep.subr.mxu0 0.0
        %1522 = vmatpush1.msra.mxu0 0.0
        %1523 = vmatprep.subr.mxu0 0.0
        %1524 = vmatpush1.msra.mxu0 0.0
        %1525 = vmatprep.mubr.f32.mxu0 0.0
        %1526 = vmatmul.mubr.f32.gmra.mrb[0].mxu0 %v1444
        %v1527 = vpop.f32.mrb[0].mxu0
        %v1528 = vadd.f32 0.0, %v1527
        %v1529 = vpop.f32.mrb[0].mxu0
        %1530 = vdwg.mxu0
        %v1531 = vadd.f32 %v1352, %v1528
        %1532 = vst.msk [vmem:[%s431] sm:$0xff] %vm439, %v1531
        %s1533 = sand.u32 %s313, 1
        %s1534 = scalar_lea.sflag [#allocation4], %s1533
        %s1535 = sand.u32 %s313, 1
        %s1536 = smul.addr %s1535, 8
        %s1537 = scalar_lea.vmem [#allocation3], %s1536
        // Predicated region
        $region73: #{tpu_custom_call.1} parent=71 // pred_check
          %p1538 = pneg %p323
        $region74: #{tpu_custom_call.1} parent=71 // pred_check_branch
          %1540 = sbr.rel (%p1538) target = $region76
        $region75: #{tpu_custom_call.1} parent=71 // pred_region
          %s1542 = ssub.s32 128, 128
          %1543 = vsyncadd %s1534, %s1542
          %s1544 = smul.addr %s27, 128
          %s1545 = scalar_lea.hbm %s13, %s1544
          %s1547 = sshll.u32 %s1537, 4
          %s1548 = int_to_ptr.vmem [resolvable:$true] %s1547
          %1550 = dma.vmem_to_hbm [thread:$0]  %s1548, 128, %s1545, %s1534
        $region76: #{tpu_custom_call.1} parent=71 // pred_fallthru
          _
      $region72: #{tpu_custom_call.1} parent=5 // pred_fallthru
        _
      %p1551 = scmp.le.s32.totalorder 2, %s22
      // Predicated region
      $region77: #{tpu_custom_call.1} parent=5 // pred_check
        %p1552 = pneg %p1551
      $region78: #{tpu_custom_call.1} parent=5 // pred_check_branch
        %1554 = sbr.rel (%p1552) target = $region80
      $region79: #{tpu_custom_call.1} parent=5 // pred_region
        %s1555 = ssub.s32 %s22, 2
        // Predicated region
        $region81: #{tpu_custom_call.1} parent=79 // pred_check
          %p1556 = pneg %p329
        $region82: #{tpu_custom_call.1} parent=79 // pred_check_branch
          %1558 = sbr.rel (%p1556) target = $region84
        $region83: #{tpu_custom_call.1} parent=79 // pred_region
          %s1559 = sand.u32 %s314, 1
          %s1560 = scalar_lea.sflag [#allocation4], %s1559
          %s1561 = sand.u32 %s314, 1
          %s1562 = smul.addr %s1561, 8
          %s1563 = scalar_lea.vmem [#allocation3], %s1562
          %1564 = dma.done %s1560, 128
        $region84: #{tpu_custom_call.1} parent=79 // pred_fallthru
          _
      $region80: #{tpu_custom_call.1} parent=5 // pred_fallthru
        _
    $region6: #{tpu_custom_call.1} parent=1 // loop_footer
      %s26 = sadd.s32 1, %s22
    $region7: #{tpu_custom_call.1} parent=1 // loop_footer_branch
      %21 = sbr.rel target = $region3
    $region8: #{tpu_custom_call.1} parent=1 // loop_exit
      _
    %1565 = vsyncpa [#allocation4], 1
    %s1566 = scalar_lea.sflag [#allocation4], 1
    %1567 = vsyncpa %s1566, 1

</llo_original>
